<compile_context>
chip_gen: v5e
topology: v5e:2x2
jax: 0.10.0
libtpu: 0.0.40
codegen_flags: <defaults>
</compile_context>

<pallas_src>
import math

import jax
import jax.numpy as jnp
from jax.experimental import pallas as pl
from jax.experimental.pallas import tpu as pltpu

# ---------------- small synthetic config (real ViT-B-32 text: 49408/77/512/8/12) ----
VOCAB = 64
CONTEXT = 8          # sequence length S
WIDTH = 32           # model width D
HEADS = 4
HEAD_DIM = WIDTH // HEADS
LAYERS = 2
MLP_DIM = 4 * WIDTH
PROJ_DIM = 16
LN_EPS = 1e-5
NEG_INF = -1e30      # finite sentinel instead of -inf (robust to lower precision)

# Storage dtype for activations / weights.  float32 here (tiny config, torch parity);
# set to jnp.bfloat16 at real sizes — kernels feed storage-dtype operands to the MXU
# and keep all elementwise math in f32.
ACT_DTYPE = jnp.float32

VMEM_LIMIT = 32 * 1024 * 1024   # explicit budget; safe on v5e/v6e (128 MiB) and v7x (64 MiB)


# ---------------------------- in-kernel math helpers --------------------------------
def _ln_f32(x, g, b):
    mu = jnp.mean(x, axis=-1, keepdims=True)
    var = jnp.mean(jnp.square(x - mu), axis=-1, keepdims=True)
    return (x - mu) * jax.lax.rsqrt(var + LN_EPS) * g + b


def _erf_f32(x):
    # Abramowitz & Stegun 7.1.26 rational approximation, |err| <= 1.5e-7.
    # TODO(synk): switch to lax.erf if/when a direct Mosaic lowering is guaranteed.
    a1, a2, a3, a4, a5 = (0.254829592, -0.284496736, 1.421413741,
                          -1.453152027, 1.061405429)
    p = 0.3275911
    sgn = jnp.where(x >= 0.0, 1.0, -1.0)
    ax = jnp.abs(x)
    t = 1.0 / (1.0 + p * ax)
    poly = ((((a5 * t + a4) * t + a3) * t + a2) * t + a1) * t
    return sgn * (1.0 - poly * jnp.exp(-ax * ax))


def _gelu_f32(x):
    return 0.5 * x * (1.0 + _erf_f32(x * (1.0 / math.sqrt(2.0))))


def _row_tile(rows):
    # biggest multiple-of-8 row tile that divides `rows` and still leaves >= 2 grid
    # steps (so v7x can shard across its 2 TensorCores); otherwise take all rows.
    for t in (512, 256, 128, 64, 32, 16, 8):
        if rows % t == 0 and rows // t >= 2:
            return t
    return rows


# ---------------------------- fused attention block kernel --------------------------
def _attn_block_kernel(x_ref, g_ref, b_ref,
                       wq_ref, bq_ref, wk_ref, bk_ref, wv_ref, bv_ref,
                       wo_ref, bo_ref, o_ref):
    # One program = one batch element: x tile is (1, S, D).
    x = x_ref[0].astype(jnp.float32)                                   # [S, D]
    S = x.shape[0]

    # LayerNorm 1 (f32 math), then drop to storage dtype for the MXU.
    h = _ln_f32(x, g_ref[...].astype(jnp.float32), b_ref[...].astype(jnp.float32))
    h = h.astype(wq_ref.dtype)

    # Causal mask built in-register: no SxS DMA per (layer, batch).
    row = jax.lax.broadcasted_iota(jnp.int32, (S, S), 0)
    col = jax.lax.broadcasted_iota(jnp.int32, (S, S), 1)
    causal = col <= row

    acc = jnp.zeros((S, WIDTH), jnp.float32)
    for hh in range(HEADS):                                            # static unroll
        # per-head projections; 1/sqrt(head_dim) already folded into wq/bq
        q = jnp.dot(h, wq_ref[hh], preferred_element_type=jnp.float32) + bq_ref[hh]
        k = jnp.dot(h, wk_ref[hh], preferred_element_type=jnp.float32) + bk_ref[hh]
        v = jnp.dot(h, wv_ref[hh], preferred_element_type=jnp.float32) + bv_ref[hh]

        s = jnp.dot(q, k.T, preferred_element_type=jnp.float32)        # [S, S]
        s = jnp.where(causal, s, NEG_INF)
        s = s - jnp.max(s, axis=-1, keepdims=True)
        p = jnp.exp(s)
        p = p * pl.reciprocal(jnp.sum(p, axis=-1, keepdims=True), approx=True)

        oh = jnp.dot(p.astype(v.dtype), v, preferred_element_type=jnp.float32)  # [S, Dh]
        # head-merge + out_proj fused:  concat_h(oh) @ W_out == sum_h oh @ W_out[h]
        acc = acc + jnp.dot(oh.astype(wo_ref.dtype), wo_ref[hh],
                            preferred_element_type=jnp.float32)

    # fused residual add
    o_ref[0] = (x + acc + bo_ref[...]).astype(o_ref.dtype)


def attn_block(x, layer):
    B, S, D = x.shape

    def full(shape):
        return pl.BlockSpec(shape, lambda b, _n=len(shape): (0,) * _n)

    tile = pl.BlockSpec((1, S, D), lambda b: (b, 0, 0))
    return pl.pallas_call(
        _attn_block_kernel,
        grid=(B,),
        in_specs=[
            tile,
            full((1, D)), full((1, D)),
            full((HEADS, D, HEAD_DIM)), full((HEADS, 1, HEAD_DIM)),
            full((HEADS, D, HEAD_DIM)), full((HEADS, 1, HEAD_DIM)),
            full((HEADS, D, HEAD_DIM)), full((HEADS, 1, HEAD_DIM)),
            full((HEADS, HEAD_DIM, D)), full((1, D)),
        ],
        out_specs=tile,
        out_shape=jax.ShapeDtypeStruct((B, S, D), x.dtype),
        compiler_params=pltpu.CompilerParams(
            dimension_semantics=("parallel",),
            vmem_limit_bytes=VMEM_LIMIT),
    )(x, layer["ln1_g"], layer["ln1_b"],
      layer["wq"], layer["bq"], layer["wk"], layer["bk"], layer["wv"], layer["bv"],
      layer["wo"], layer["bo"])


# ---------------------------- fused MLP block kernel ---------------------------------
def _mlp_block_kernel(x_ref, g_ref, b_ref, wfc_ref, bfc_ref, wpr_ref, bpr_ref, o_ref):
    x = x_ref[...].astype(jnp.float32)                                 # [rows_tile, D]
    h = _ln_f32(x, g_ref[...].astype(jnp.float32), b_ref[...].astype(jnp.float32))
    h = jnp.dot(h.astype(wfc_ref.dtype), wfc_ref[...],
                preferred_element_type=jnp.float32) + bfc_ref[...]
    h = _gelu_f32(h)                                                   # exact erf GELU, f32
    y = jnp.dot(h.astype(wpr_ref.dtype), wpr_ref[...],
                preferred_element_type=jnp.float32) + bpr_ref[...]
    o_ref[...] = (x + y).astype(o_ref.dtype)                           # fused residual


def mlp_block(x, layer):
    B, S, D = x.shape
    rows = B * S
    x2 = x.reshape(rows, D)                     # merge of leading dims: no data movement
    tr = _row_tile(rows)
    out = pl.pallas_call(
        _mlp_block_kernel,
        grid=(rows // tr,),
        in_specs=[
            pl.BlockSpec((tr, D), lambda r: (r, 0)),
            pl.BlockSpec((1, D), lambda r: (0, 0)),
            pl.BlockSpec((1, D), lambda r: (0, 0)),
            pl.BlockSpec((D, MLP_DIM), lambda r: (0, 0)),      # weights: constant index
            pl.BlockSpec((1, MLP_DIM), lambda r: (0, 0)),      # -> stay resident in VMEM
            pl.BlockSpec((MLP_DIM, D), lambda r: (0, 0)),
            pl.BlockSpec((1, D), lambda r: (0, 0)),
        ],
        out_specs=pl.BlockSpec((tr, D), lambda r: (r, 0)),
        out_shape=jax.ShapeDtypeStruct((rows, D), x.dtype),
        compiler_params=pltpu.CompilerParams(
            dimension_semantics=("parallel",),
            vmem_limit_bytes=VMEM_LIMIT),
    )(x2, layer["ln2_g"], layer["ln2_b"], layer["w_fc"], layer["b_fc"],
      layer["w_proj"], layer["b_proj"])
    return out.reshape(B, S, D)


# ---------------------------- gridded final LayerNorm --------------------------------
def _ln_kernel(x_ref, g_ref, b_ref, o_ref):
    x = x_ref[...].astype(jnp.float32)
    o_ref[...] = _ln_f32(x, g_ref[...].astype(jnp.float32),
                         b_ref[...].astype(jnp.float32)).astype(o_ref.dtype)


def layernorm_rows(x2d, g, b):
    rows, D = x2d.shape
    tr = _row_tile(rows)
    return pl.pallas_call(
        _ln_kernel,
        grid=(rows // tr,),
        in_specs=[pl.BlockSpec((tr, D), lambda r: (r, 0)),
                  pl.BlockSpec((1, D), lambda r: (0, 0)),
                  pl.BlockSpec((1, D), lambda r: (0, 0))],
        out_specs=pl.BlockSpec((tr, D), lambda r: (r, 0)),
        out_shape=jax.ShapeDtypeStruct((rows, D), x2d.dtype),
        compiler_params=pltpu.CompilerParams(
            dimension_semantics=("parallel",),
            vmem_limit_bytes=VMEM_LIMIT),
    )(x2d, g, b)


# ---------------------------- parameter construction --------------------------------
def init_params(key):
    """Params in the original (torch-like) layout: W stored [in, out] so x @ W == torch x @ W.T."""
    def nrm(k, shape, std=0.02):
        return (std * jax.random.normal(k, shape)).astype(jnp.float32)

    keys = iter(jax.random.split(key, 8 + 12 * LAYERS))
    params = {
        "token_embedding": nrm(next(keys), (VOCAB, WIDTH)),
        "positional_embedding": nrm(next(keys), (CONTEXT, WIDTH), std=0.01),
        "lnf_g": jnp.ones((WIDTH,), jnp.float32),
        "lnf_b": jnp.zeros((WIDTH,), jnp.float32),
        "text_projection": nrm(next(keys), (WIDTH, PROJ_DIM), std=WIDTH ** -0.5),
        # causal mask is built in-register inside the attention kernel (no stored mask)
        "layers": [],
    }
    for _ in range(LAYERS):
        layer = {
            "ln1_g": jnp.ones((WIDTH,), jnp.float32),
            "ln1_b": jnp.zeros((WIDTH,), jnp.float32),
            "w_qkv": nrm(next(keys), (WIDTH, 3 * WIDTH), std=WIDTH ** -0.5),
            "b_qkv": jnp.zeros((3 * WIDTH,), jnp.float32),
            "w_out": nrm(next(keys), (WIDTH, WIDTH), std=WIDTH ** -0.5),
            "b_out": jnp.zeros((WIDTH,), jnp.float32),
            "ln2_g": jnp.ones((WIDTH,), jnp.float32),
            "ln2_b": jnp.zeros((WIDTH,), jnp.float32),
            "w_fc": nrm(next(keys), (WIDTH, MLP_DIM), std=WIDTH ** -0.5),
            "b_fc": jnp.zeros((MLP_DIM,), jnp.float32),
            "w_proj": nrm(next(keys), (MLP_DIM, WIDTH), std=MLP_DIM ** -0.5),
            "b_proj": jnp.zeros((WIDTH,), jnp.float32),
        }
        params["layers"].append(layer)
    return params


def preprocess_params(params):
    """One-time prep: split QKV/out weights per-head, fold 1/sqrt(Dh) into Q,
    reshape biases/LN params to 2-D, cast to the storage dtype."""
    scale = 1.0 / math.sqrt(HEAD_DIM)

    def head_split_in(w):   # [D, D] (out = heads major) -> [H, D, Dh]
        return w.reshape(WIDTH, HEADS, HEAD_DIM).transpose(1, 0, 2)

    pp = {
        "token_embedding": params["token_embedding"].astype(ACT_DTYPE),
        "positional_embedding": params["positional_embedding"].astype(ACT_DTYPE),
        "lnf_g": params["lnf_g"].reshape(1, WIDTH).astype(jnp.float32),
        "lnf_b": params["lnf_b"].reshape(1, WIDTH).astype(jnp.float32),
        "text_projection": params["text_projection"].astype(jnp.float32),
        "layers": [],
    }
    for layer in params["layers"]:
        w_qkv, b_qkv = layer["w_qkv"], layer["b_qkv"]
        pp["layers"].append({
            "ln1_g": layer["ln1_g"].reshape(1, WIDTH).astype(jnp.float32),
            "ln1_b": layer["ln1_b"].reshape(1, WIDTH).astype(jnp.float32),
            "wq": head_split_in(w_qkv[:, :WIDTH] * scale).astype(ACT_DTYPE),
            "bq": (b_qkv[:WIDTH] * scale).reshape(HEADS, 1, HEAD_DIM).astype(ACT_DTYPE),
            "wk": head_split_in(w_qkv[:, WIDTH:2 * WIDTH]).astype(ACT_DTYPE),
            "bk": b_qkv[WIDTH:2 * WIDTH].reshape(HEADS, 1, HEAD_DIM).astype(ACT_DTYPE),
            "wv": head_split_in(w_qkv[:, 2 * WIDTH:]).astype(ACT_DTYPE),
            "bv": b_qkv[2 * WIDTH:].reshape(HEADS, 1, HEAD_DIM).astype(ACT_DTYPE),
            "wo": layer["w_out"].reshape(HEADS, HEAD_DIM, WIDTH).astype(ACT_DTYPE),
            "bo": layer["b_out"].reshape(1, WIDTH).astype(ACT_DTYPE),
            "ln2_g": layer["ln2_g"].reshape(1, WIDTH).astype(jnp.float32),
            "ln2_b": layer["ln2_b"].reshape(1, WIDTH).astype(jnp.float32),
            "w_fc": layer["w_fc"].astype(ACT_DTYPE),
            "b_fc": layer["b_fc"].reshape(1, MLP_DIM).astype(ACT_DTYPE),
            "w_proj": layer["w_proj"].astype(ACT_DTYPE),
            "b_proj": layer["b_proj"].reshape(1, WIDTH).astype(ACT_DTYPE),
        })
    return pp


# ---------------------------- forward pass -------------------------------------------
def encode_text(tokens, pp):
    B, S = tokens.shape
    # token + positional embedding (gather is glue, done in plain JAX)
    x = jnp.take(pp["token_embedding"], tokens, axis=0)               # [B, S, D]
    x = (x + pp["positional_embedding"][None, :, :]).astype(ACT_DTYPE)

    for layer in pp["layers"]:
        x = attn_block(x, layer)      # LN1 + QKV + causal MHA + out_proj + residual
        x = mlp_block(x, layer)       # LN2 + c_fc + GELU + c_proj + residual

    xf = layernorm_rows(x.reshape(B * S, WIDTH), pp["lnf_g"], pp["lnf_b"])
    xf = xf.reshape(B, S, WIDTH)

    # pooled features at EOT position (highest token id per sequence)
    eot = jnp.argmax(tokens, axis=-1)                                 # [B]
    pooled = xf[jnp.arange(B), eot].astype(jnp.float32)               # [B, D]
    # tiny [B, D] x [D, P] matmul: too small to amortize a pallas_call -> plain XLA
    return jnp.dot(pooled, pp["text_projection"],
                   preferred_element_type=jnp.float32)                # [B, PROJ_DIM]


# ---------------------------- main ----------------------------------------------------
if __name__ == "__main__":
    key = jax.random.PRNGKey(0)
    k_params, k_tok = jax.random.split(key)
    params = init_params(k_params)
    pp = preprocess_params(params)     # hoisted weight prep (scale fold, head split)

    B = 2
    tokens = jax.random.randint(k_tok, (B, CONTEXT), 0, VOCAB, dtype=jnp.int32)

    out = jax.jit(encode_text)(tokens, pp)
    out = jax.block_until_ready(out)
    assert out.shape == (B, PROJ_DIM) and out.dtype == jnp.float32
    assert bool(jnp.all(jnp.isfinite(out)))
    print("KERNEL_OK")
</pallas_src>

<mosaic_0001>
module attributes {stable_mosaic.version = 11 : i64} {
  func.func @_mlp_block_kernel(%arg0: i32, %arg1: memref<8x32xf32, #tpu.memory_space<vmem>>, %arg2: memref<1x32xf32, #tpu.memory_space<vmem>>, %arg3: memref<1x32xf32, #tpu.memory_space<vmem>>, %arg4: memref<32x128xf32, #tpu.memory_space<vmem>>, %arg5: memref<1x128xf32, #tpu.memory_space<vmem>>, %arg6: memref<128x32xf32, #tpu.memory_space<vmem>>, %arg7: memref<1x32xf32, #tpu.memory_space<vmem>>, %arg8: memref<8x32xf32, #tpu.memory_space<vmem>>) attributes {dimension_semantics = [#tpu.dimension_semantics<parallel>], iteration_bounds = array<i64: 2>, scalar_prefetch = 0 : i64, scratch_operands = 0 : i64, tpu.core_type = #tpu.core_type<tc>, window_params = [{transform_indices = @transform_0, window_bounds = array<i64: 8, 32>}, {pipeline_mode = #tpu.pipeline_mode<synchronous>, transform_indices = @transform_1, window_bounds = array<i64: 1, 32>}, {pipeline_mode = #tpu.pipeline_mode<synchronous>, transform_indices = @transform_2, window_bounds = array<i64: 1, 32>}, {pipeline_mode = #tpu.pipeline_mode<synchronous>, transform_indices = @transform_3, window_bounds = array<i64: 32, 128>}, {pipeline_mode = #tpu.pipeline_mode<synchronous>, transform_indices = @transform_4, window_bounds = array<i64: 1, 128>}, {pipeline_mode = #tpu.pipeline_mode<synchronous>, transform_indices = @transform_5, window_bounds = array<i64: 128, 32>}, {pipeline_mode = #tpu.pipeline_mode<synchronous>, transform_indices = @transform_6, window_bounds = array<i64: 1, 32>}, {transform_indices = @transform_7, window_bounds = array<i64: 8, 32>}]} {
    %c0 = arith.constant 0 : index
    %c0_0 = arith.constant 0 : index
    %0 = vector.load %arg1[%c0, %c0_0] : memref<8x32xf32, #tpu.memory_space<vmem>>, vector<8x32xf32>
    %c0_1 = arith.constant 0 : index
    %c0_2 = arith.constant 0 : index
    %1 = vector.load %arg2[%c0_1, %c0_2] : memref<1x32xf32, #tpu.memory_space<vmem>>, vector<1x32xf32>
    %c0_3 = arith.constant 0 : index
    %c0_4 = arith.constant 0 : index
    %2 = vector.load %arg3[%c0_3, %c0_4] : memref<1x32xf32, #tpu.memory_space<vmem>>, vector<1x32xf32>
    %cst = arith.constant dense<0.000000e+00> : vector<8xf32>
    %3 = vector.multi_reduction <add>, %0, %cst [1] : vector<8x32xf32> to vector<8xf32>
    %4 = vector.shape_cast %3 : vector<8xf32> to vector<8x1xf32>
    %cst_5 = arith.constant 3.200000e+01 : f32
    %5 = vector.broadcast %cst_5 : f32 to vector<8x1xf32>
    %6 = arith.divf %4, %5 : vector<8x1xf32>
    %7 = vector.broadcast %6 : vector<8x1xf32> to vector<8x32xf32>
    %8 = arith.subf %0, %7 : vector<8x32xf32>
    %9 = arith.mulf %8, %8 : vector<8x32xf32>
    %cst_6 = arith.constant dense<0.000000e+00> : vector<8xf32>
    %10 = vector.multi_reduction <add>, %9, %cst_6 [1] : vector<8x32xf32> to vector<8xf32>
    %11 = vector.shape_cast %10 : vector<8xf32> to vector<8x1xf32>
    %cst_7 = arith.constant 3.200000e+01 : f32
    %12 = vector.broadcast %cst_7 : f32 to vector<8x1xf32>
    %13 = arith.divf %11, %12 : vector<8x1xf32>
    %14 = vector.broadcast %6 : vector<8x1xf32> to vector<8x32xf32>
    %15 = arith.subf %0, %14 : vector<8x32xf32>
    %cst_8 = arith.constant 9.99999974E-6 : f32
    %16 = vector.broadcast %cst_8 : f32 to vector<8x1xf32>
    %17 = arith.addf %13, %16 : vector<8x1xf32>
    %18 = math.rsqrt %17 : vector<8x1xf32>
    %19 = vector.broadcast %18 : vector<8x1xf32> to vector<8x32xf32>
    %20 = arith.mulf %15, %19 : vector<8x32xf32>
    %21 = vector.broadcast %1 : vector<1x32xf32> to vector<8x32xf32>
    %22 = arith.mulf %20, %21 : vector<8x32xf32>
    %23 = vector.broadcast %2 : vector<1x32xf32> to vector<8x32xf32>
    %24 = arith.addf %22, %23 : vector<8x32xf32>
    %c0_9 = arith.constant 0 : index
    %c0_10 = arith.constant 0 : index
    %25 = vector.load %arg4[%c0_9, %c0_10] : memref<32x128xf32, #tpu.memory_space<vmem>>, vector<32x128xf32>
    %cst_11 = arith.constant dense<0.000000e+00> : vector<8x128xf32>
    %26 = tpu.matmul %24, %25, %cst_11 {dimension_numbers = #tpu.dot_dimension_numbers<[1], [0], [0], [1], [0, 0, 1, 1], [], []>} : vector<8x32xf32>, vector<32x128xf32>, vector<8x128xf32> -> vector<8x128xf32>
    %c0_12 = arith.constant 0 : index
    %c0_13 = arith.constant 0 : index
    %27 = vector.load %arg5[%c0_12, %c0_13] : memref<1x128xf32, #tpu.memory_space<vmem>>, vector<1x128xf32>
    %28 = vector.broadcast %27 : vector<1x128xf32> to vector<8x128xf32>
    %29 = arith.addf %26, %28 : vector<8x128xf32>
    %cst_14 = arith.constant 5.000000e-01 : f32
    %30 = vector.broadcast %cst_14 : f32 to vector<8x128xf32>
    %31 = arith.mulf %30, %29 : vector<8x128xf32>
    %cst_15 = arith.constant 0.707106769 : f32
    %32 = vector.broadcast %cst_15 : f32 to vector<8x128xf32>
    %33 = arith.mulf %29, %32 : vector<8x128xf32>
    %cst_16 = arith.constant 0.000000e+00 : f32
    %34 = vector.broadcast %cst_16 : f32 to vector<8x128xf32>
    %35 = arith.cmpf oge, %33, %34 : vector<8x128xf32>
    %cst_17 = arith.constant 1.000000e+00 : f32
    %cst_18 = arith.constant -1.000000e+00 : f32
    %36 = vector.broadcast %cst_17 : f32 to vector<8x128xf32>
    %37 = vector.broadcast %cst_18 : f32 to vector<8x128xf32>
    %38 = arith.select %35, %36, %37 : vector<8x128xi1>, vector<8x128xf32>
    %39 = math.absf %33 : vector<8x128xf32>
    %cst_19 = arith.constant 0.327591091 : f32
    %40 = vector.broadcast %cst_19 : f32 to vector<8x128xf32>
    %41 = arith.mulf %40, %39 : vector<8x128xf32>
    %cst_20 = arith.constant 1.000000e+00 : f32
    %42 = vector.broadcast %cst_20 : f32 to vector<8x128xf32>
    %43 = arith.addf %42, %41 : vector<8x128xf32>
    %cst_21 = arith.constant 1.000000e+00 : f32
    %44 = vector.broadcast %cst_21 : f32 to vector<8x128xf32>
    %45 = arith.divf %44, %43 : vector<8x128xf32>
    %cst_22 = arith.constant 1.06140542 : f32
    %46 = vector.broadcast %cst_22 : f32 to vector<8x128xf32>
    %47 = arith.mulf %46, %45 : vector<8x128xf32>
    %cst_23 = arith.constant -1.45315206 : f32
    %48 = vector.broadcast %cst_23 : f32 to vector<8x128xf32>
    %49 = arith.addf %47, %48 : vector<8x128xf32>
    %50 = arith.mulf %49, %45 : vector<8x128xf32>
    %cst_24 = arith.constant 1.42141378 : f32
    %51 = vector.broadcast %cst_24 : f32 to vector<8x128xf32>
    %52 = arith.addf %50, %51 : vector<8x128xf32>
    %53 = arith.mulf %52, %45 : vector<8x128xf32>
    %cst_25 = arith.constant -0.284496725 : f32
    %54 = vector.broadcast %cst_25 : f32 to vector<8x128xf32>
    %55 = arith.addf %53, %54 : vector<8x128xf32>
    %56 = arith.mulf %55, %45 : vector<8x128xf32>
    %cst_26 = arith.constant 0.254829586 : f32
    %57 = vector.broadcast %cst_26 : f32 to vector<8x128xf32>
    %58 = arith.addf %56, %57 : vector<8x128xf32>
    %59 = arith.mulf %58, %45 : vector<8x128xf32>
    %cst_27 = arith.constant 0.000000e+00 : f32
    %60 = vector.broadcast %cst_27 : f32 to vector<8x128xf32>
    %61 = arith.subf %60, %39 : vector<8x128xf32>
    %62 = arith.mulf %61, %39 : vector<8x128xf32>
    %63 = math.exp %62 : vector<8x128xf32>
    %64 = arith.mulf %59, %63 : vector<8x128xf32>
    %cst_28 = arith.constant 1.000000e+00 : f32
    %65 = vector.broadcast %cst_28 : f32 to vector<8x128xf32>
    %66 = arith.subf %65, %64 : vector<8x128xf32>
    %67 = arith.mulf %38, %66 : vector<8x128xf32>
    %cst_29 = arith.constant 1.000000e+00 : f32
    %68 = vector.broadcast %cst_29 : f32 to vector<8x128xf32>
    %69 = arith.addf %68, %67 : vector<8x128xf32>
    %70 = arith.mulf %31, %69 : vector<8x128xf32>
    %c0_30 = arith.constant 0 : index
    %c0_31 = arith.constant 0 : index
    %71 = vector.load %arg6[%c0_30, %c0_31] : memref<128x32xf32, #tpu.memory_space<vmem>>, vector<128x32xf32>
    %cst_32 = arith.constant dense<0.000000e+00> : vector<8x32xf32>
    %72 = tpu.matmul %70, %71, %cst_32 {dimension_numbers = #tpu.dot_dimension_numbers<[1], [0], [0], [1], [0, 0, 1, 1], [], []>} : vector<8x128xf32>, vector<128x32xf32>, vector<8x32xf32> -> vector<8x32xf32>
    %c0_33 = arith.constant 0 : index
    %c0_34 = arith.constant 0 : index
    %73 = vector.load %arg7[%c0_33, %c0_34] : memref<1x32xf32, #tpu.memory_space<vmem>>, vector<1x32xf32>
    %74 = vector.broadcast %73 : vector<1x32xf32> to vector<8x32xf32>
    %75 = arith.addf %72, %74 : vector<8x32xf32>
    %76 = arith.addf %0, %75 : vector<8x32xf32>
    %c0_35 = arith.constant 0 : index
    %c0_36 = arith.constant 0 : index
    %77 = vector.load %arg8[%c0_35, %c0_36] : memref<8x32xf32, #tpu.memory_space<vmem>>, vector<8x32xf32>
    tpu.vector_store %arg8[%c0_35, %c0_36], %76 {strides = array<i32>} : memref<8x32xf32, #tpu.memory_space<vmem>>, vector<8x32xf32>,
    return
  }
  func.func @transform_0(%arg0: i32) -> (i32, i32) {
    %c0_i32 = arith.constant 0 : i32
    %c0_i32_0 = arith.constant 0 : i32
    return %arg0, %c0_i32 : i32, i32
  }
  func.func @transform_1(%arg0: i32) -> (i32, i32) {
    %c0_i32 = arith.constant 0 : i32
    %c0_i32_0 = arith.constant 0 : i32
    %c0_i32_1 = arith.constant 0 : i32
    return %c0_i32, %c0_i32_0 : i32, i32
  }
  func.func @transform_2(%arg0: i32) -> (i32, i32) {
    %c0_i32 = arith.constant 0 : i32
    %c0_i32_0 = arith.constant 0 : i32
    %c0_i32_1 = arith.constant 0 : i32
    return %c0_i32, %c0_i32_0 : i32, i32
  }
  func.func @transform_3(%arg0: i32) -> (i32, i32) {
    %c0_i32 = arith.constant 0 : i32
    %c0_i32_0 = arith.constant 0 : i32
    %c0_i32_1 = arith.constant 0 : i32
    return %c0_i32, %c0_i32_0 : i32, i32
  }
  func.func @transform_4(%arg0: i32) -> (i32, i32) {
    %c0_i32 = arith.constant 0 : i32
    %c0_i32_0 = arith.constant 0 : i32
    %c0_i32_1 = arith.constant 0 : i32
    return %c0_i32, %c0_i32_0 : i32, i32
  }
  func.func @transform_5(%arg0: i32) -> (i32, i32) {
    %c0_i32 = arith.constant 0 : i32
    %c0_i32_0 = arith.constant 0 : i32
    %c0_i32_1 = arith.constant 0 : i32
    return %c0_i32, %c0_i32_0 : i32, i32
  }
  func.func @transform_6(%arg0: i32) -> (i32, i32) {
    %c0_i32 = arith.constant 0 : i32
    %c0_i32_0 = arith.constant 0 : i32
    %c0_i32_1 = arith.constant 0 : i32
    return %c0_i32, %c0_i32_0 : i32, i32
  }
  func.func @transform_7(%arg0: i32) -> (i32, i32) {
    %c0_i32 = arith.constant 0 : i32
    %c0_i32_0 = arith.constant 0 : i32
    return %arg0, %c0_i32 : i32, i32
  }
}

module attributes {stable_mosaic.version = 11 : i64} {
  func.func @_attn_block_kernel(%arg0: i32, %arg1: memref<1x8x32xf32, #tpu.memory_space<vmem>>, %arg2: memref<1x32xf32, #tpu.memory_space<vmem>>, %arg3: memref<1x32xf32, #tpu.memory_space<vmem>>, %arg4: memref<4x32x8xf32, #tpu.memory_space<vmem>>, %arg5: memref<4x1x8xf32, #tpu.memory_space<vmem>>, %arg6: memref<4x32x8xf32, #tpu.memory_space<vmem>>, %arg7: memref<4x1x8xf32, #tpu.memory_space<vmem>>, %arg8: memref<4x32x8xf32, #tpu.memory_space<vmem>>, %arg9: memref<4x1x8xf32, #tpu.memory_space<vmem>>, %arg10: memref<4x8x32xf32, #tpu.memory_space<vmem>>, %arg11: memref<1x32xf32, #tpu.memory_space<vmem>>, %arg12: memref<1x8x32xf32, #tpu.memory_space<vmem>>) attributes {dimension_semantics = [#tpu.dimension_semantics<parallel>], iteration_bounds = array<i64: 2>, scalar_prefetch = 0 : i64, scratch_operands = 0 : i64, tpu.core_type = #tpu.core_type<tc>, window_params = [{transform_indices = @transform_0, window_bounds = array<i64: 1, 8, 32>}, {pipeline_mode = #tpu.pipeline_mode<synchronous>, transform_indices = @transform_1, window_bounds = array<i64: 1, 32>}, {pipeline_mode = #tpu.pipeline_mode<synchronous>, transform_indices = @transform_2, window_bounds = array<i64: 1, 32>}, {pipeline_mode = #tpu.pipeline_mode<synchronous>, transform_indices = @transform_3, window_bounds = array<i64: 4, 32, 8>}, {pipeline_mode = #tpu.pipeline_mode<synchronous>, transform_indices = @transform_4, window_bounds = array<i64: 4, 1, 8>}, {pipeline_mode = #tpu.pipeline_mode<synchronous>, transform_indices = @transform_5, window_bounds = array<i64: 4, 32, 8>}, {pipeline_mode = #tpu.pipeline_mode<synchronous>, transform_indices = @transform_6, window_bounds = array<i64: 4, 1, 8>}, {pipeline_mode = #tpu.pipeline_mode<synchronous>, transform_indices = @transform_7, window_bounds = array<i64: 4, 32, 8>}, {pipeline_mode = #tpu.pipeline_mode<synchronous>, transform_indices = @transform_8, window_bounds = array<i64: 4, 1, 8>}, {pipeline_mode = #tpu.pipeline_mode<synchronous>, transform_indices = @transform_9, window_bounds = array<i64: 4, 8, 32>}, {pipeline_mode = #tpu.pipeline_mode<synchronous>, transform_indices = @transform_10, window_bounds = array<i64: 1, 32>}, {transform_indices = @transform_11, window_bounds = array<i64: 1, 8, 32>}]} {
    %c0 = arith.constant 0 : index
    %c0_0 = arith.constant 0 : index
    %c0_1 = arith.constant 0 : index
    %0 = vector.load %arg1[%c0, %c0_0, %c0_1] : memref<1x8x32xf32, #tpu.memory_space<vmem>>, vector<1x8x32xf32>
    %1 = vector.shape_cast %0 : vector<1x8x32xf32> to vector<8x32xf32>
    %c0_2 = arith.constant 0 : index
    %c0_3 = arith.constant 0 : index
    %2 = vector.load %arg2[%c0_2, %c0_3] : memref<1x32xf32, #tpu.memory_space<vmem>>, vector<1x32xf32>
    %c0_4 = arith.constant 0 : index
    %c0_5 = arith.constant 0 : index
    %3 = vector.load %arg3[%c0_4, %c0_5] : memref<1x32xf32, #tpu.memory_space<vmem>>, vector<1x32xf32>
    %cst = arith.constant dense<0.000000e+00> : vector<8xf32>
    %4 = vector.multi_reduction <add>, %1, %cst [1] : vector<8x32xf32> to vector<8xf32>
    %5 = vector.shape_cast %4 : vector<8xf32> to vector<8x1xf32>
    %cst_6 = arith.constant 3.200000e+01 : f32
    %6 = vector.broadcast %cst_6 : f32 to vector<8x1xf32>
    %7 = arith.divf %5, %6 : vector<8x1xf32>
    %8 = vector.broadcast %7 : vector<8x1xf32> to vector<8x32xf32>
    %9 = arith.subf %1, %8 : vector<8x32xf32>
    %10 = arith.mulf %9, %9 : vector<8x32xf32>
    %cst_7 = arith.constant dense<0.000000e+00> : vector<8xf32>
    %11 = vector.multi_reduction <add>, %10, %cst_7 [1] : vector<8x32xf32> to vector<8xf32>
    %12 = vector.shape_cast %11 : vector<8xf32> to vector<8x1xf32>
    %cst_8 = arith.constant 3.200000e+01 : f32
    %13 = vector.broadcast %cst_8 : f32 to vector<8x1xf32>
    %14 = arith.divf %12, %13 : vector<8x1xf32>
    %15 = vector.broadcast %7 : vector<8x1xf32> to vector<8x32xf32>
    %16 = arith.subf %1, %15 : vector<8x32xf32>
    %cst_9 = arith.constant 9.99999974E-6 : f32
    %17 = vector.broadcast %cst_9 : f32 to vector<8x1xf32>
    %18 = arith.addf %14, %17 : vector<8x1xf32>
    %19 = math.rsqrt %18 : vector<8x1xf32>
    %20 = vector.broadcast %19 : vector<8x1xf32> to vector<8x32xf32>
    %21 = arith.mulf %16, %20 : vector<8x32xf32>
    %22 = vector.broadcast %2 : vector<1x32xf32> to vector<8x32xf32>
    %23 = arith.mulf %21, %22 : vector<8x32xf32>
    %24 = vector.broadcast %3 : vector<1x32xf32> to vector<8x32xf32>
    %25 = arith.addf %23, %24 : vector<8x32xf32>
    %26 = tpu.iota {dimensions = array<i32: 0>} : vector<8x8xi32>
    %27 = tpu.iota {dimensions = array<i32: 1>} : vector<8x8xi32>
    %28 = arith.cmpi sle, %27, %26 : vector<8x8xi32>
    %cst_10 = arith.constant 0.000000e+00 : f32
    %29 = vector.broadcast %cst_10 : f32 to vector<8x32xf32>
    %c0_11 = arith.constant 0 : index
    %c0_12 = arith.constant 0 : index
    %c0_13 = arith.constant 0 : index
    %30 = vector.load %arg4[%c0_11, %c0_12, %c0_13] : memref<4x32x8xf32, #tpu.memory_space<vmem>>, vector<1x32x8xf32>
    %31 = vector.shape_cast %30 : vector<1x32x8xf32> to vector<32x8xf32>
    %cst_14 = arith.constant dense<0.000000e+00> : vector<8x8xf32>
    %32 = tpu.matmul %25, %31, %cst_14 {dimension_numbers = #tpu.dot_dimension_numbers<[1], [0], [0], [1], [0, 0, 1, 1], [], []>} : vector<8x32xf32>, vector<32x8xf32>, vector<8x8xf32> -> vector<8x8xf32>
    %c0_15 = arith.constant 0 : index
    %c0_16 = arith.constant 0 : index
    %c0_17 = arith.constant 0 : index
    %33 = vector.load %arg5[%c0_15, %c0_16, %c0_17] : memref<4x1x8xf32, #tpu.memory_space<vmem>>, vector<1x1x8xf32>
    %34 = vector.shape_cast %33 : vector<1x1x8xf32> to vector<1x8xf32>
    %35 = vector.broadcast %34 : vector<1x8xf32> to vector<8x8xf32>
    %36 = arith.addf %32, %35 : vector<8x8xf32>
    %c0_18 = arith.constant 0 : index
    %c0_19 = arith.constant 0 : index
    %c0_20 = arith.constant 0 : index
    %37 = vector.load %arg6[%c0_18, %c0_19, %c0_20] : memref<4x32x8xf32, #tpu.memory_space<vmem>>, vector<1x32x8xf32>
    %38 = vector.shape_cast %37 : vector<1x32x8xf32> to vector<32x8xf32>
    %cst_21 = arith.constant dense<0.000000e+00> : vector<8x8xf32>
    %39 = tpu.matmul %25, %38, %cst_21 {dimension_numbers = #tpu.dot_dimension_numbers<[1], [0], [0], [1], [0, 0, 1, 1], [], []>} : vector<8x32xf32>, vector<32x8xf32>, vector<8x8xf32> -> vector<8x8xf32>
    %c0_22 = arith.constant 0 : index
    %c0_23 = arith.constant 0 : index
    %c0_24 = arith.constant 0 : index
    %40 = vector.load %arg7[%c0_22, %c0_23, %c0_24] : memref<4x1x8xf32, #tpu.memory_space<vmem>>, vector<1x1x8xf32>
    %41 = vector.shape_cast %40 : vector<1x1x8xf32> to vector<1x8xf32>
    %42 = vector.broadcast %41 : vector<1x8xf32> to vector<8x8xf32>
    %43 = arith.addf %39, %42 : vector<8x8xf32>
    %c0_25 = arith.constant 0 : index
    %c0_26 = arith.constant 0 : index
    %c0_27 = arith.constant 0 : index
    %44 = vector.load %arg8[%c0_25, %c0_26, %c0_27] : memref<4x32x8xf32, #tpu.memory_space<vmem>>, vector<1x32x8xf32>
    %45 = vector.shape_cast %44 : vector<1x32x8xf32> to vector<32x8xf32>
    %cst_28 = arith.constant dense<0.000000e+00> : vector<8x8xf32>
    %46 = tpu.matmul %25, %45, %cst_28 {dimension_numbers = #tpu.dot_dimension_numbers<[1], [0], [0], [1], [0, 0, 1, 1], [], []>} : vector<8x32xf32>, vector<32x8xf32>, vector<8x8xf32> -> vector<8x8xf32>
    %c0_29 = arith.constant 0 : index
    %c0_30 = arith.constant 0 : index
    %c0_31 = arith.constant 0 : index
    %47 = vector.load %arg9[%c0_29, %c0_30, %c0_31] : memref<4x1x8xf32, #tpu.memory_space<vmem>>, vector<1x1x8xf32>
    %48 = vector.shape_cast %47 : vector<1x1x8xf32> to vector<1x8xf32>
    %49 = vector.broadcast %48 : vector<1x8xf32> to vector<8x8xf32>
    %50 = arith.addf %46, %49 : vector<8x8xf32>
    %51 = tpu.transpose %43, [1, 0] : vector<8x8xf32> -> vector<8x8xf32>
    %cst_32 = arith.constant dense<0.000000e+00> : vector<8x8xf32>
    %52 = tpu.matmul %36, %51, %cst_32 {dimension_numbers = #tpu.dot_dimension_numbers<[1], [0], [0], [1], [0, 0, 1, 1], [], []>} : vector<8x8xf32>, vector<8x8xf32>, vector<8x8xf32> -> vector<8x8xf32>
    %cst_33 = arith.constant -1.000000e+30 : f32
    %53 = vector.broadcast %cst_33 : f32 to vector<8x8xf32>
    %54 = arith.select %28, %52, %53 : vector<8x8xi1>, vector<8x8xf32>
    %cst_34 = arith.constant dense<0xFF800000> : vector<8xf32>
    %55 = vector.multi_reduction <maximumf>, %54, %cst_34 [1] : vector<8x8xf32> to vector<8xf32>
    %56 = vector.shape_cast %55 : vector<8xf32> to vector<8x1xf32>
    %57 = vector.broadcast %56 : vector<8x1xf32> to vector<8x8xf32>
    %58 = arith.subf %54, %57 : vector<8x8xf32>
    %59 = math.exp %58 : vector<8x8xf32>
    %cst_35 = arith.constant dense<0.000000e+00> : vector<8xf32>
    %60 = vector.multi_reduction <add>, %59, %cst_35 [1] : vector<8x8xf32> to vector<8xf32>
    %61 = vector.shape_cast %60 : vector<8xf32> to vector<8x1xf32>
    %62 = tpu.reciprocal %61 {approx = true} : vector<8x1xf32> -> vector<8x1xf32>
    %63 = vector.broadcast %62 : vector<8x1xf32> to vector<8x8xf32>
    %64 = arith.mulf %59, %63 : vector<8x8xf32>
    %cst_36 = arith.constant dense<0.000000e+00> : vector<8x8xf32>
    %65 = tpu.matmul %64, %50, %cst_36 {dimension_numbers = #tpu.dot_dimension_numbers<[1], [0], [0], [1], [0, 0, 1, 1], [], []>} : vector<8x8xf32>, vector<8x8xf32>, vector<8x8xf32> -> vector<8x8xf32>
    %c0_37 = arith.constant 0 : index
    %c0_38 = arith.constant 0 : index
    %c0_39 = arith.constant 0 : index
    %66 = vector.load %arg10[%c0_37, %c0_38, %c0_39] : memref<4x8x32xf32, #tpu.memory_space<vmem>>, vector<1x8x32xf32>
    %67 = vector.shape_cast %66 : vector<1x8x32xf32> to vector<8x32xf32>
    %cst_40 = arith.constant dense<0.000000e+00> : vector<8x32xf32>
    %68 = tpu.matmul %65, %67, %cst_40 {dimension_numbers = #tpu.dot_dimension_numbers<[1], [0], [0], [1], [0, 0, 1, 1], [], []>} : vector<8x8xf32>, vector<8x32xf32>, vector<8x32xf32> -> vector<8x32xf32>
    %69 = arith.addf %29, %68 : vector<8x32xf32>
    %c1 = arith.constant 1 : index
    %c0_41 = arith.constant 0 : index
    %c0_42 = arith.constant 0 : index
    %70 = vector.load %arg4[%c1, %c0_41, %c0_42] : memref<4x32x8xf32, #tpu.memory_space<vmem>>, vector<1x32x8xf32>
    %71 = vector.shape_cast %70 : vector<1x32x8xf32> to vector<32x8xf32>
    %cst_43 = arith.constant dense<0.000000e+00> : vector<8x8xf32>
    %72 = tpu.matmul %25, %71, %cst_43 {dimension_numbers = #tpu.dot_dimension_numbers<[1], [0], [0], [1], [0, 0, 1, 1], [], []>} : vector<8x32xf32>, vector<32x8xf32>, vector<8x8xf32> -> vector<8x8xf32>
    %c1_44 = arith.constant 1 : index
    %c0_45 = arith.constant 0 : index
    %c0_46 = arith.constant 0 : index
    %73 = vector.load %arg5[%c1_44, %c0_45, %c0_46] : memref<4x1x8xf32, #tpu.memory_space<vmem>>, vector<1x1x8xf32>
    %74 = vector.shape_cast %73 : vector<1x1x8xf32> to vector<1x8xf32>
    %75 = vector.broadcast %74 : vector<1x8xf32> to vector<8x8xf32>
    %76 = arith.addf %72, %75 : vector<8x8xf32>
    %c1_47 = arith.constant 1 : index
    %c0_48 = arith.constant 0 : index
    %c0_49 = arith.constant 0 : index
    %77 = vector.load %arg6[%c1_47, %c0_48, %c0_49] : memref<4x32x8xf32, #tpu.memory_space<vmem>>, vector<1x32x8xf32>
    %78 = vector.shape_cast %77 : vector<1x32x8xf32> to vector<32x8xf32>
    %cst_50 = arith.constant dense<0.000000e+00> : vector<8x8xf32>
    %79 = tpu.matmul %25, %78, %cst_50 {dimension_numbers = #tpu.dot_dimension_numbers<[1], [0], [0], [1], [0, 0, 1, 1], [], []>} : vector<8x32xf32>, vector<32x8xf32>, vector<8x8xf32> -> vector<8x8xf32>
    %c1_51 = arith.constant 1 : index
    %c0_52 = arith.constant 0 : index
    %c0_53 = arith.constant 0 : index
    %80 = vector.load %arg7[%c1_51, %c0_52, %c0_53] : memref<4x1x8xf32, #tpu.memory_space<vmem>>, vector<1x1x8xf32>
    %81 = vector.shape_cast %80 : vector<1x1x8xf32> to vector<1x8xf32>
    %82 = vector.broadcast %81 : vector<1x8xf32> to vector<8x8xf32>
    %83 = arith.addf %79, %82 : vector<8x8xf32>
    %c1_54 = arith.constant 1 : index
    %c0_55 = arith.constant 0 : index
    %c0_56 = arith.constant 0 : index
    %84 = vector.load %arg8[%c1_54, %c0_55, %c0_56] : memref<4x32x8xf32, #tpu.memory_space<vmem>>, vector<1x32x8xf32>
    %85 = vector.shape_cast %84 : vector<1x32x8xf32> to vector<32x8xf32>
    %cst_57 = arith.constant dense<0.000000e+00> : vector<8x8xf32>
    %86 = tpu.matmul %25, %85, %cst_57 {dimension_numbers = #tpu.dot_dimension_numbers<[1], [0], [0], [1], [0, 0, 1, 1], [], []>} : vector<8x32xf32>, vector<32x8xf32>, vector<8x8xf32> -> vector<8x8xf32>
    %c1_58 = arith.constant 1 : index
    %c0_59 = arith.constant 0 : index
    %c0_60 = arith.constant 0 : index
    %87 = vector.load %arg9[%c1_58, %c0_59, %c0_60] : memref<4x1x8xf32, #tpu.memory_space<vmem>>, vector<1x1x8xf32>
    %88 = vector.shape_cast %87 : vector<1x1x8xf32> to vector<1x8xf32>
    %89 = vector.broadcast %88 : vector<1x8xf32> to vector<8x8xf32>
    %90 = arith.addf %86, %89 : vector<8x8xf32>
    %91 = tpu.transpose %83, [1, 0] : vector<8x8xf32> -> vector<8x8xf32>
    %cst_61 = arith.constant dense<0.000000e+00> : vector<8x8xf32>
    %92 = tpu.matmul %76, %91, %cst_61 {dimension_numbers = #tpu.dot_dimension_numbers<[1], [0], [0], [1], [0, 0, 1, 1], [], []>} : vector<8x8xf32>, vector<8x8xf32>, vector<8x8xf32> -> vector<8x8xf32>
    %cst_62 = arith.constant -1.000000e+30 : f32
    %93 = vector.broadcast %cst_62 : f32 to vector<8x8xf32>
    %94 = arith.select %28, %92, %93 : vector<8x8xi1>, vector<8x8xf32>
    %cst_63 = arith.constant dense<0xFF800000> : vector<8xf32>
    %95 = vector.multi_reduction <maximumf>, %94, %cst_63 [1] : vector<8x8xf32> to vector<8xf32>
    %96 = vector.shape_cast %95 : vector<8xf32> to vector<8x1xf32>
    %97 = vector.broadcast %96 : vector<8x1xf32> to vector<8x8xf32>
    %98 = arith.subf %94, %97 : vector<8x8xf32>
    %99 = math.exp %98 : vector<8x8xf32>
    %cst_64 = arith.constant dense<0.000000e+00> : vector<8xf32>
    %100 = vector.multi_reduction <add>, %99, %cst_64 [1] : vector<8x8xf32> to vector<8xf32>
    %101 = vector.shape_cast %100 : vector<8xf32> to vector<8x1xf32>
    %102 = tpu.reciprocal %101 {approx = true} : vector<8x1xf32> -> vector<8x1xf32>
    %103 = vector.broadcast %102 : vector<8x1xf32> to vector<8x8xf32>
    %104 = arith.mulf %99, %103 : vector<8x8xf32>
    %cst_65 = arith.constant dense<0.000000e+00> : vector<8x8xf32>
    %105 = tpu.matmul %104, %90, %cst_65 {dimension_numbers = #tpu.dot_dimension_numbers<[1], [0], [0], [1], [0, 0, 1, 1], [], []>} : vector<8x8xf32>, vector<8x8xf32>, vector<8x8xf32> -> vector<8x8xf32>
    %c1_66 = arith.constant 1 : index
    %c0_67 = arith.constant 0 : index
    %c0_68 = arith.constant 0 : index
    %106 = vector.load %arg10[%c1_66, %c0_67, %c0_68] : memref<4x8x32xf32, #tpu.memory_space<vmem>>, vector<1x8x32xf32>
    %107 = vector.shape_cast %106 : vector<1x8x32xf32> to vector<8x32xf32>
    %cst_69 = arith.constant dense<0.000000e+00> : vector<8x32xf32>
    %108 = tpu.matmul %105, %107, %cst_69 {dimension_numbers = #tpu.dot_dimension_numbers<[1], [0], [0], [1], [0, 0, 1, 1], [], []>} : vector<8x8xf32>, vector<8x32xf32>, vector<8x32xf32> -> vector<8x32xf32>
    %109 = arith.addf %69, %108 : vector<8x32xf32>
    %c2 = arith.constant 2 : index
    %c0_70 = arith.constant 0 : index
    %c0_71 = arith.constant 0 : index
    %110 = vector.load %arg4[%c2, %c0_70, %c0_71] : memref<4x32x8xf32, #tpu.memory_space<vmem>>, vector<1x32x8xf32>
    %111 = vector.shape_cast %110 : vector<1x32x8xf32> to vector<32x8xf32>
    %cst_72 = arith.constant dense<0.000000e+00> : vector<8x8xf32>
    %112 = tpu.matmul %25, %111, %cst_72 {dimension_numbers = #tpu.dot_dimension_numbers<[1], [0], [0], [1], [0, 0, 1, 1], [], []>} : vector<8x32xf32>, vector<32x8xf32>, vector<8x8xf32> -> vector<8x8xf32>
    %c2_73 = arith.constant 2 : index
    %c0_74 = arith.constant 0 : index
    %c0_75 = arith.constant 0 : index
    %113 = vector.load %arg5[%c2_73, %c0_74, %c0_75] : memref<4x1x8xf32, #tpu.memory_space<vmem>>, vector<1x1x8xf32>
    %114 = vector.shape_cast %113 : vector<1x1x8xf32> to vector<1x8xf32>
    %115 = vector.broadcast %114 : vector<1x8xf32> to vector<8x8xf32>
    %116 = arith.addf %112, %115 : vector<8x8xf32>
    %c2_76 = arith.constant 2 : index
    %c0_77 = arith.constant 0 : index
    %c0_78 = arith.constant 0 : index
    %117 = vector.load %arg6[%c2_76, %c0_77, %c0_78] : memref<4x32x8xf32, #tpu.memory_space<vmem>>, vector<1x32x8xf32>
    %118 = vector.shape_cast %117 : vector<1x32x8xf32> to vector<32x8xf32>
    %cst_79 = arith.constant dense<0.000000e+00> : vector<8x8xf32>
    %119 = tpu.matmul %25, %118, %cst_79 {dimension_numbers = #tpu.dot_dimension_numbers<[1], [0], [0], [1], [0, 0, 1, 1], [], []>} : vector<8x32xf32>, vector<32x8xf32>, vector<8x8xf32> -> vector<8x8xf32>
    %c2_80 = arith.constant 2 : index
    %c0_81 = arith.constant 0 : index
    %c0_82 = arith.constant 0 : index
    %120 = vector.load %arg7[%c2_80, %c0_81, %c0_82] : memref<4x1x8xf32, #tpu.memory_space<vmem>>, vector<1x1x8xf32>
    %121 = vector.shape_cast %120 : vector<1x1x8xf32> to vector<1x8xf32>
    %122 = vector.broadcast %121 : vector<1x8xf32> to vector<8x8xf32>
    %123 = arith.addf %119, %122 : vector<8x8xf32>
    %c2_83 = arith.constant 2 : index
    %c0_84 = arith.constant 0 : index
    %c0_85 = arith.constant 0 : index
    %124 = vector.load %arg8[%c2_83, %c0_84, %c0_85] : memref<4x32x8xf32, #tpu.memory_space<vmem>>, vector<1x32x8xf32>
    %125 = vector.shape_cast %124 : vector<1x32x8xf32> to vector<32x8xf32>
    %cst_86 = arith.constant dense<0.000000e+00> : vector<8x8xf32>
    %126 = tpu.matmul %25, %125, %cst_86 {dimension_numbers = #tpu.dot_dimension_numbers<[1], [0], [0], [1], [0, 0, 1, 1], [], []>} : vector<8x32xf32>, vector<32x8xf32>, vector<8x8xf32> -> vector<8x8xf32>
    %c2_87 = arith.constant 2 : index
    %c0_88 = arith.constant 0 : index
    %c0_89 = arith.constant 0 : index
    %127 = vector.load %arg9[%c2_87, %c0_88, %c0_89] : memref<4x1x8xf32, #tpu.memory_space<vmem>>, vector<1x1x8xf32>
    %128 = vector.shape_cast %127 : vector<1x1x8xf32> to vector<1x8xf32>
    %129 = vector.broadcast %128 : vector<1x8xf32> to vector<8x8xf32>
    %130 = arith.addf %126, %129 : vector<8x8xf32>
    %131 = tpu.transpose %123, [1, 0] : vector<8x8xf32> -> vector<8x8xf32>
    %cst_90 = arith.constant dense<0.000000e+00> : vector<8x8xf32>
    %132 = tpu.matmul %116, %131, %cst_90 {dimension_numbers = #tpu.dot_dimension_numbers<[1], [0], [0], [1], [0, 0, 1, 1], [], []>} : vector<8x8xf32>, vector<8x8xf32>, vector<8x8xf32> -> vector<8x8xf32>
    %cst_91 = arith.constant -1.000000e+30 : f32
    %133 = vector.broadcast %cst_91 : f32 to vector<8x8xf32>
    %134 = arith.select %28, %132, %133 : vector<8x8xi1>, vector<8x8xf32>
    %cst_92 = arith.constant dense<0xFF800000> : vector<8xf32>
    %135 = vector.multi_reduction <maximumf>, %134, %cst_92 [1] : vector<8x8xf32> to vector<8xf32>
    %136 = vector.shape_cast %135 : vector<8xf32> to vector<8x1xf32>
    %137 = vector.broadcast %136 : vector<8x1xf32> to vector<8x8xf32>
    %138 = arith.subf %134, %137 : vector<8x8xf32>
    %139 = math.exp %138 : vector<8x8xf32>
    %cst_93 = arith.constant dense<0.000000e+00> : vector<8xf32>
    %140 = vector.multi_reduction <add>, %139, %cst_93 [1] : vector<8x8xf32> to vector<8xf32>
    %141 = vector.shape_cast %140 : vector<8xf32> to vector<8x1xf32>
    %142 = tpu.reciprocal %141 {approx = true} : vector<8x1xf32> -> vector<8x1xf32>
    %143 = vector.broadcast %142 : vector<8x1xf32> to vector<8x8xf32>
    %144 = arith.mulf %139, %143 : vector<8x8xf32>
    %cst_94 = arith.constant dense<0.000000e+00> : vector<8x8xf32>
    %145 = tpu.matmul %144, %130, %cst_94 {dimension_numbers = #tpu.dot_dimension_numbers<[1], [0], [0], [1], [0, 0, 1, 1], [], []>} : vector<8x8xf32>, vector<8x8xf32>, vector<8x8xf32> -> vector<8x8xf32>
    %c2_95 = arith.constant 2 : index
    %c0_96 = arith.constant 0 : index
    %c0_97 = arith.constant 0 : index
    %146 = vector.load %arg10[%c2_95, %c0_96, %c0_97] : memref<4x8x32xf32, #tpu.memory_space<vmem>>, vector<1x8x32xf32>
    %147 = vector.shape_cast %146 : vector<1x8x32xf32> to vector<8x32xf32>
    %cst_98 = arith.constant dense<0.000000e+00> : vector<8x32xf32>
    %148 = tpu.matmul %145, %147, %cst_98 {dimension_numbers = #tpu.dot_dimension_numbers<[1], [0], [0], [1], [0, 0, 1, 1], [], []>} : vector<8x8xf32>, vector<8x32xf32>, vector<8x32xf32> -> vector<8x32xf32>
    %149 = arith.addf %109, %148 : vector<8x32xf32>
    %c3 = arith.constant 3 : index
    %c0_99 = arith.constant 0 : index
    %c0_100 = arith.constant 0 : index
    %150 = vector.load %arg4[%c3, %c0_99, %c0_100] : memref<4x32x8xf32, #tpu.memory_space<vmem>>, vector<1x32x8xf32>
    %151 = vector.shape_cast %150 : vector<1x32x8xf32> to vector<32x8xf32>
    %cst_101 = arith.constant dense<0.000000e+00> : vector<8x8xf32>
    %152 = tpu.matmul %25, %151, %cst_101 {dimension_numbers = #tpu.dot_dimension_numbers<[1], [0], [0], [1], [0, 0, 1, 1], [], []>} : vector<8x32xf32>, vector<32x8xf32>, vector<8x8xf32> -> vector<8x8xf32>
    %c3_102 = arith.constant 3 : index
    %c0_103 = arith.constant 0 : index
    %c0_104 = arith.constant 0 : index
    %153 = vector.load %arg5[%c3_102, %c0_103, %c0_104] : memref<4x1x8xf32, #tpu.memory_space<vmem>>, vector<1x1x8xf32>
    %154 = vector.shape_cast %153 : vector<1x1x8xf32> to vector<1x8xf32>
    %155 = vector.broadcast %154 : vector<1x8xf32> to vector<8x8xf32>
    %156 = arith.addf %152, %155 : vector<8x8xf32>
    %c3_105 = arith.constant 3 : index
    %c0_106 = arith.constant 0 : index
    %c0_107 = arith.constant 0 : index
    %157 = vector.load %arg6[%c3_105, %c0_106, %c0_107] : memref<4x32x8xf32, #tpu.memory_space<vmem>>, vector<1x32x8xf32>
    %158 = vector.shape_cast %157 : vector<1x32x8xf32> to vector<32x8xf32>
    %cst_108 = arith.constant dense<0.000000e+00> : vector<8x8xf32>
    %159 = tpu.matmul %25, %158, %cst_108 {dimension_numbers = #tpu.dot_dimension_numbers<[1], [0], [0], [1], [0, 0, 1, 1], [], []>} : vector<8x32xf32>, vector<32x8xf32>, vector<8x8xf32> -> vector<8x8xf32>
    %c3_109 = arith.constant 3 : index
    %c0_110 = arith.constant 0 : index
    %c0_111 = arith.constant 0 : index
    %160 = vector.load %arg7[%c3_109, %c0_110, %c0_111] : memref<4x1x8xf32, #tpu.memory_space<vmem>>, vector<1x1x8xf32>
    %161 = vector.shape_cast %160 : vector<1x1x8xf32> to vector<1x8xf32>
    %162 = vector.broadcast %161 : vector<1x8xf32> to vector<8x8xf32>
    %163 = arith.addf %159, %162 : vector<8x8xf32>
    %c3_112 = arith.constant 3 : index
    %c0_113 = arith.constant 0 : index
    %c0_114 = arith.constant 0 : index
    %164 = vector.load %arg8[%c3_112, %c0_113, %c0_114] : memref<4x32x8xf32, #tpu.memory_space<vmem>>, vector<1x32x8xf32>
    %165 = vector.shape_cast %164 : vector<1x32x8xf32> to vector<32x8xf32>
    %cst_115 = arith.constant dense<0.000000e+00> : vector<8x8xf32>
    %166 = tpu.matmul %25, %165, %cst_115 {dimension_numbers = #tpu.dot_dimension_numbers<[1], [0], [0], [1], [0, 0, 1, 1], [], []>} : vector<8x32xf32>, vector<32x8xf32>, vector<8x8xf32> -> vector<8x8xf32>
    %c3_116 = arith.constant 3 : index
    %c0_117 = arith.constant 0 : index
    %c0_118 = arith.constant 0 : index
    %167 = vector.load %arg9[%c3_116, %c0_117, %c0_118] : memref<4x1x8xf32, #tpu.memory_space<vmem>>, vector<1x1x8xf32>
    %168 = vector.shape_cast %167 : vector<1x1x8xf32> to vector<1x8xf32>
    %169 = vector.broadcast %168 : vector<1x8xf32> to vector<8x8xf32>
    %170 = arith.addf %166, %169 : vector<8x8xf32>
    %171 = tpu.transpose %163, [1, 0] : vector<8x8xf32> -> vector<8x8xf32>
    %cst_119 = arith.constant dense<0.000000e+00> : vector<8x8xf32>
    %172 = tpu.matmul %156, %171, %cst_119 {dimension_numbers = #tpu.dot_dimension_numbers<[1], [0], [0], [1], [0, 0, 1, 1], [], []>} : vector<8x8xf32>, vector<8x8xf32>, vector<8x8xf32> -> vector<8x8xf32>
    %cst_120 = arith.constant -1.000000e+30 : f32
    %173 = vector.broadcast %cst_120 : f32 to vector<8x8xf32>
    %174 = arith.select %28, %172, %173 : vector<8x8xi1>, vector<8x8xf32>
    %cst_121 = arith.constant dense<0xFF800000> : vector<8xf32>
    %175 = vector.multi_reduction <maximumf>, %174, %cst_121 [1] : vector<8x8xf32> to vector<8xf32>
    %176 = vector.shape_cast %175 : vector<8xf32> to vector<8x1xf32>
    %177 = vector.broadcast %176 : vector<8x1xf32> to vector<8x8xf32>
    %178 = arith.subf %174, %177 : vector<8x8xf32>
    %179 = math.exp %178 : vector<8x8xf32>
    %cst_122 = arith.constant dense<0.000000e+00> : vector<8xf32>
    %180 = vector.multi_reduction <add>, %179, %cst_122 [1] : vector<8x8xf32> to vector<8xf32>
    %181 = vector.shape_cast %180 : vector<8xf32> to vector<8x1xf32>
    %182 = tpu.reciprocal %181 {approx = true} : vector<8x1xf32> -> vector<8x1xf32>
    %183 = vector.broadcast %182 : vector<8x1xf32> to vector<8x8xf32>
    %184 = arith.mulf %179, %183 : vector<8x8xf32>
    %cst_123 = arith.constant dense<0.000000e+00> : vector<8x8xf32>
    %185 = tpu.matmul %184, %170, %cst_123 {dimension_numbers = #tpu.dot_dimension_numbers<[1], [0], [0], [1], [0, 0, 1, 1], [], []>} : vector<8x8xf32>, vector<8x8xf32>, vector<8x8xf32> -> vector<8x8xf32>
    %c3_124 = arith.constant 3 : index
    %c0_125 = arith.constant 0 : index
    %c0_126 = arith.constant 0 : index
    %186 = vector.load %arg10[%c3_124, %c0_125, %c0_126] : memref<4x8x32xf32, #tpu.memory_space<vmem>>, vector<1x8x32xf32>
    %187 = vector.shape_cast %186 : vector<1x8x32xf32> to vector<8x32xf32>
    %cst_127 = arith.constant dense<0.000000e+00> : vector<8x32xf32>
    %188 = tpu.matmul %185, %187, %cst_127 {dimension_numbers = #tpu.dot_dimension_numbers<[1], [0], [0], [1], [0, 0, 1, 1], [], []>} : vector<8x8xf32>, vector<8x32xf32>, vector<8x32xf32> -> vector<8x32xf32>
    %189 = arith.addf %149, %188 : vector<8x32xf32>
    %190 = arith.addf %1, %189 : vector<8x32xf32>
    %c0_128 = arith.constant 0 : index
    %c0_129 = arith.constant 0 : index
    %191 = vector.load %arg11[%c0_128, %c0_129] : memref<1x32xf32, #tpu.memory_space<vmem>>, vector<1x32xf32>
    %192 = vector.broadcast %191 : vector<1x32xf32> to vector<8x32xf32>
    %193 = arith.addf %190, %192 : vector<8x32xf32>
    %c0_130 = arith.constant 0 : index
    %c0_131 = arith.constant 0 : index
    %c0_132 = arith.constant 0 : index
    %194 = vector.load %arg12[%c0_130, %c0_131, %c0_132] : memref<1x8x32xf32, #tpu.memory_space<vmem>>, vector<1x8x32xf32>
    %195 = vector.shape_cast %194 : vector<1x8x32xf32> to vector<8x32xf32>
    %196 = vector.shape_cast %193 : vector<8x32xf32> to vector<1x8x32xf32>
    tpu.vector_store %arg12[%c0_130, %c0_131, %c0_132], %196 {strides = array<i32>} : memref<1x8x32xf32, #tpu.memory_space<vmem>>, vector<1x8x32xf32>,
    return
  }
  func.func @transform_0(%arg0: i32) -> (i32, i32, i32) {
    %c0_i32 = arith.constant 0 : i32
    %c0_i32_0 = arith.constant 0 : i32
    %c0_i32_1 = arith.constant 0 : i32
    return %arg0, %c0_i32, %c0_i32_0 : i32, i32, i32
  }
  func.func @transform_1(%arg0: i32) -> (i32, i32) {
    %c0_i32 = arith.constant 0 : i32
    %c0_i32_0 = arith.constant 0 : i32
    %c0_i32_1 = arith.constant 0 : i32
    return %c0_i32, %c0_i32_0 : i32, i32
  }
  func.func @transform_2(%arg0: i32) -> (i32, i32) {
    %c0_i32 = arith.constant 0 : i32
    %c0_i32_0 = arith.constant 0 : i32
    %c0_i32_1 = arith.constant 0 : i32
    return %c0_i32, %c0_i32_0 : i32, i32
  }
  func.func @transform_3(%arg0: i32) -> (i32, i32, i32) {
    %c0_i32 = arith.constant 0 : i32
    %c0_i32_0 = arith.constant 0 : i32
    %c0_i32_1 = arith.constant 0 : i32
    %c0_i32_2 = arith.constant 0 : i32
    return %c0_i32, %c0_i32_0, %c0_i32_1 : i32, i32, i32
  }
  func.func @transform_4(%arg0: i32) -> (i32, i32, i32) {
    %c0_i32 = arith.constant 0 : i32
    %c0_i32_0 = arith.constant 0 : i32
    %c0_i32_1 = arith.constant 0 : i32
    %c0_i32_2 = arith.constant 0 : i32
    return %c0_i32, %c0_i32_0, %c0_i32_1 : i32, i32, i32
  }
  func.func @transform_5(%arg0: i32) -> (i32, i32, i32) {
    %c0_i32 = arith.constant 0 : i32
    %c0_i32_0 = arith.constant 0 : i32
    %c0_i32_1 = arith.constant 0 : i32
    %c0_i32_2 = arith.constant 0 : i32
    return %c0_i32, %c0_i32_0, %c0_i32_1 : i32, i32, i32
  }
  func.func @transform_6(%arg0: i32) -> (i32, i32, i32) {
    %c0_i32 = arith.constant 0 : i32
    %c0_i32_0 = arith.constant 0 : i32
    %c0_i32_1 = arith.constant 0 : i32
    %c0_i32_2 = arith.constant 0 : i32
    return %c0_i32, %c0_i32_0, %c0_i32_1 : i32, i32, i32
  }
  func.func @transform_7(%arg0: i32) -> (i32, i32, i32) {
    %c0_i32 = arith.constant 0 : i32
    %c0_i32_0 = arith.constant 0 : i32
    %c0_i32_1 = arith.constant 0 : i32
    %c0_i32_2 = arith.constant 0 : i32
    return %c0_i32, %c0_i32_0, %c0_i32_1 : i32, i32, i32
  }
  func.func @transform_8(%arg0: i32) -> (i32, i32, i32) {
    %c0_i32 = arith.constant 0 : i32
    %c0_i32_0 = arith.constant 0 : i32
    %c0_i32_1 = arith.constant 0 : i32
    %c0_i32_2 = arith.constant 0 : i32
    return %c0_i32, %c0_i32_0, %c0_i32_1 : i32, i32, i32
  }
  func.func @transform_9(%arg0: i32) -> (i32, i32, i32) {
    %c0_i32 = arith.constant 0 : i32
    %c0_i32_0 = arith.constant 0 : i32
    %c0_i32_1 = arith.constant 0 : i32
    %c0_i32_2 = arith.constant 0 : i32
    return %c0_i32, %c0_i32_0, %c0_i32_1 : i32, i32, i32
  }
  func.func @transform_10(%arg0: i32) -> (i32, i32) {
    %c0_i32 = arith.constant 0 : i32
    %c0_i32_0 = arith.constant 0 : i32
    %c0_i32_1 = arith.constant 0 : i32
    return %c0_i32, %c0_i32_0 : i32, i32
  }
  func.func @transform_11(%arg0: i32) -> (i32, i32, i32) {
    %c0_i32 = arith.constant 0 : i32
    %c0_i32_0 = arith.constant 0 : i32
    %c0_i32_1 = arith.constant 0 : i32
    return %arg0, %c0_i32, %c0_i32_0 : i32, i32, i32
  }
}

module attributes {stable_mosaic.version = 11 : i64} {
  func.func @_ln_kernel(%arg0: i32, %arg1: memref<8x32xf32, #tpu.memory_space<vmem>>, %arg2: memref<1x32xf32, #tpu.memory_space<vmem>>, %arg3: memref<1x32xf32, #tpu.memory_space<vmem>>, %arg4: memref<8x32xf32, #tpu.memory_space<vmem>>) attributes {dimension_semantics = [#tpu.dimension_semantics<parallel>], iteration_bounds = array<i64: 2>, scalar_prefetch = 0 : i64, scratch_operands = 0 : i64, tpu.core_type = #tpu.core_type<tc>, window_params = [{transform_indices = @transform_0, window_bounds = array<i64: 8, 32>}, {pipeline_mode = #tpu.pipeline_mode<synchronous>, transform_indices = @transform_1, window_bounds = array<i64: 1, 32>}, {pipeline_mode = #tpu.pipeline_mode<synchronous>, transform_indices = @transform_2, window_bounds = array<i64: 1, 32>}, {transform_indices = @transform_3, window_bounds = array<i64: 8, 32>}]} {
    %c0 = arith.constant 0 : index
    %c0_0 = arith.constant 0 : index
    %0 = vector.load %arg1[%c0, %c0_0] : memref<8x32xf32, #tpu.memory_space<vmem>>, vector<8x32xf32>
    %c0_1 = arith.constant 0 : index
    %c0_2 = arith.constant 0 : index
    %1 = vector.load %arg2[%c0_1, %c0_2] : memref<1x32xf32, #tpu.memory_space<vmem>>, vector<1x32xf32>
    %c0_3 = arith.constant 0 : index
    %c0_4 = arith.constant 0 : index
    %2 = vector.load %arg3[%c0_3, %c0_4] : memref<1x32xf32, #tpu.memory_space<vmem>>, vector<1x32xf32>
    %cst = arith.constant dense<0.000000e+00> : vector<8xf32>
    %3 = vector.multi_reduction <add>, %0, %cst [1] : vector<8x32xf32> to vector<8xf32>
    %4 = vector.shape_cast %3 : vector<8xf32> to vector<8x1xf32>
    %cst_5 = arith.constant 3.200000e+01 : f32
    %5 = vector.broadcast %cst_5 : f32 to vector<8x1xf32>
    %6 = arith.divf %4, %5 : vector<8x1xf32>
    %7 = vector.broadcast %6 : vector<8x1xf32> to vector<8x32xf32>
    %8 = arith.subf %0, %7 : vector<8x32xf32>
    %9 = arith.mulf %8, %8 : vector<8x32xf32>
    %cst_6 = arith.constant dense<0.000000e+00> : vector<8xf32>
    %10 = vector.multi_reduction <add>, %9, %cst_6 [1] : vector<8x32xf32> to vector<8xf32>
    %11 = vector.shape_cast %10 : vector<8xf32> to vector<8x1xf32>
    %cst_7 = arith.constant 3.200000e+01 : f32
    %12 = vector.broadcast %cst_7 : f32 to vector<8x1xf32>
    %13 = arith.divf %11, %12 : vector<8x1xf32>
    %14 = vector.broadcast %6 : vector<8x1xf32> to vector<8x32xf32>
    %15 = arith.subf %0, %14 : vector<8x32xf32>
    %cst_8 = arith.constant 9.99999974E-6 : f32
    %16 = vector.broadcast %cst_8 : f32 to vector<8x1xf32>
    %17 = arith.addf %13, %16 : vector<8x1xf32>
    %18 = math.rsqrt %17 : vector<8x1xf32>
    %19 = vector.broadcast %18 : vector<8x1xf32> to vector<8x32xf32>
    %20 = arith.mulf %15, %19 : vector<8x32xf32>
    %21 = vector.broadcast %1 : vector<1x32xf32> to vector<8x32xf32>
    %22 = arith.mulf %20, %21 : vector<8x32xf32>
    %23 = vector.broadcast %2 : vector<1x32xf32> to vector<8x32xf32>
    %24 = arith.addf %22, %23 : vector<8x32xf32>
    %c0_9 = arith.constant 0 : index
    %c0_10 = arith.constant 0 : index
    %25 = vector.load %arg4[%c0_9, %c0_10] : memref<8x32xf32, #tpu.memory_space<vmem>>, vector<8x32xf32>
    tpu.vector_store %arg4[%c0_9, %c0_10], %24 {strides = array<i32>} : memref<8x32xf32, #tpu.memory_space<vmem>>, vector<8x32xf32>,
    return
  }
  func.func @transform_0(%arg0: i32) -> (i32, i32) {
    %c0_i32 = arith.constant 0 : i32
    %c0_i32_0 = arith.constant 0 : i32
    return %arg0, %c0_i32 : i32, i32
  }
  func.func @transform_1(%arg0: i32) -> (i32, i32) {
    %c0_i32 = arith.constant 0 : i32
    %c0_i32_0 = arith.constant 0 : i32
    %c0_i32_1 = arith.constant 0 : i32
    return %c0_i32, %c0_i32_0 : i32, i32
  }
  func.func @transform_2(%arg0: i32) -> (i32, i32) {
    %c0_i32 = arith.constant 0 : i32
    %c0_i32_0 = arith.constant 0 : i32
    %c0_i32_1 = arith.constant 0 : i32
    return %c0_i32, %c0_i32_0 : i32, i32
  }
  func.func @transform_3(%arg0: i32) -> (i32, i32) {
    %c0_i32 = arith.constant 0 : i32
    %c0_i32_0 = arith.constant 0 : i32
    return %arg0, %c0_i32 : i32, i32
  }
}

</mosaic_0001>

<llo_original>
// kernel: encode_text.9
$region0: #{encode_text.9}
  #allocation0 [shape = 'u32[]', space=smem, size = 0x4, offset = 0x4, fixed_abs, tag = 'smem constant byte address 0x4 - core index']
  #allocation1 [shape = 'u32[72,128]{1,0:T(1,128)}', space=vmem, size = 0x9000, scoped, tag = 'internal scratch']
  %s0 = inlined_call_operand.vmem [shape: f32[16,32], index: 0, kind: input, shape index: {}]
  %s1 = inlined_call_operand.vmem [shape: f32[1,32], index: 1, kind: input, shape index: {}]
  %s2 = inlined_call_operand.vmem [shape: f32[1,32], index: 2, kind: input, shape index: {}]
  %s3 = inlined_call_operand.vmem [shape: f32[16,32], index: 3, kind: output, shape index: {}]
  %s4 = sld [smem:[#allocation0]]
  $region45: #{encode_text.9} parent=0
    _
  %s6 = ssub.s32 1, %s4
  %s7 = scalar_select 0, %s6, %s4
  loop: start=0, step=1, limit=4
  $region2: #{encode_text.9} parent=0 // loop_pre_header
    _
  $region3: #{encode_text.9} parent=0 // loop_header
    %s9 = sphi 0, %s13
    %p10 = scmp.ge.s32.totalorder %s9, 4
    %s19 = sphi 0, %s21
    %s22 = sphi 0, %s19
    %s23 = sphi 0, %s22
    %s39 = sphi 0, %s23
    %s43 = sphi 0, %s43
    %s45 = sphi 0, %s43
    %s46 = sphi 0, %s45
    %s60 = sphi 0, %s46
    %s64 = sphi 0, %s64
    %s66 = sphi 0, %s64
    %s67 = sphi 0, %s66
    %s81 = sphi 0, %s67
    %s87 = sphi 0, %s89
    %s90 = sphi 0, %s87
    %s91 = sphi 0, %s90
    %s107 = sphi 0, %s91
  $region4: #{encode_text.9} parent=0 // loop_header_branch
    %12 = sbr.rel (%p10) target = $region8
  $region5: #{encode_text.9} parent=0 // loop_body
    %s14 = ssub.s32 %s9, 1
    %s15 = ssub.s32 %s9, 2
    %s16 = sadd.s32 %s9, 1
    %s17 = ssub.s32 %s9, %s16
    %p18 = scmp.eq.s32.totalorder %s17, 0
    %s20 = sadd.s32 %s19, 1
    %s21 = scalar_select %p18, %s19, %s20
    %p24 = pneg %p18
    %p25 = scmp.eq.s32.totalorder %s9, 1
    %p26 = por %p24, %p25
    %p27 = scmp.ne.s32.totalorder %s19, %s22
    %p28 = scmp.eq.s32.totalorder %s9, 0
    %p29 = por %p27, %p28
    %p30 = scmp.ne.s32.totalorder %s19, %s22
    %p31 = scmp.eq.s32.totalorder %s14, 1
    %p32 = por %p30, %p31
    %p33 = scmp.ne.s32.totalorder %s22, %s23
    %p34 = scmp.eq.s32.totalorder %s14, 0
    %p35 = por %p33, %p34
    %p36 = scmp.ne.s32.totalorder %s22, %s23
    %p37 = scmp.eq.s32.totalorder %s15, 1
    %p38 = por %p36, %p37
    %p40 = scmp.ne.s32.totalorder %s23, %s39
    %p41 = scmp.eq.s32.totalorder %s15, 0
    %p42 = por %p40, %p41
    %s44 = sadd.s32 %s43, 1
    %p47 = scmp.eq.s32.totalorder %s9, 1
    %p48 = scmp.ne.s32.totalorder %s43, %s45
    %p49 = scmp.eq.s32.totalorder %s9, 0
    %p50 = por %p48, %p49
    %p51 = scmp.ne.s32.totalorder %s43, %s45
    %p52 = scmp.eq.s32.totalorder %s14, 1
    %p53 = por %p51, %p52
    %p54 = scmp.ne.s32.totalorder %s45, %s46
    %p55 = scmp.eq.s32.totalorder %s14, 0
    %p56 = por %p54, %p55
    %p57 = scmp.ne.s32.totalorder %s45, %s46
    %p58 = scmp.eq.s32.totalorder %s15, 1
    %p59 = por %p57, %p58
    %p61 = scmp.ne.s32.totalorder %s46, %s60
    %p62 = scmp.eq.s32.totalorder %s15, 0
    %p63 = por %p61, %p62
    %s65 = sadd.s32 %s64, 1
    %p68 = scmp.eq.s32.totalorder %s9, 1
    %p69 = scmp.ne.s32.totalorder %s64, %s66
    %p70 = scmp.eq.s32.totalorder %s9, 0
    %p71 = por %p69, %p70
    %p72 = scmp.ne.s32.totalorder %s64, %s66
    %p73 = scmp.eq.s32.totalorder %s14, 1
    %p74 = por %p72, %p73
    %p75 = scmp.ne.s32.totalorder %s66, %s67
    %p76 = scmp.eq.s32.totalorder %s14, 0
    %p77 = por %p75, %p76
    %p78 = scmp.ne.s32.totalorder %s66, %s67
    %p79 = scmp.eq.s32.totalorder %s15, 1
    %p80 = por %p78, %p79
    %p82 = scmp.ne.s32.totalorder %s67, %s81
    %p83 = scmp.eq.s32.totalorder %s15, 0
    %p84 = por %p82, %p83
    %s85 = ssub.s32 %s9, %s16
    %p86 = scmp.eq.s32.totalorder %s85, 0
    %s88 = sadd.s32 %s87, 1
    %s89 = scalar_select %p86, %s87, %s88
    %p92 = pneg %p86
    %p93 = scmp.eq.s32.totalorder %s9, 1
    %p94 = por %p92, %p93
    %p95 = scmp.ne.s32.totalorder %s87, %s90
    %p96 = scmp.eq.s32.totalorder %s9, 0
    %p97 = por %p95, %p96
    %p98 = scmp.ne.s32.totalorder %s87, %s90
    %p99 = scmp.eq.s32.totalorder %s14, 1
    %p100 = por %p98, %p99
    %p101 = scmp.ne.s32.totalorder %s90, %s91
    %p102 = scmp.eq.s32.totalorder %s14, 0
    %p103 = por %p101, %p102
    %p104 = scmp.ne.s32.totalorder %s90, %s91
    %p105 = scmp.eq.s32.totalorder %s15, 1
    %p106 = por %p104, %p105
    %p108 = scmp.ne.s32.totalorder %s91, %s107
    %p109 = scmp.eq.s32.totalorder %s15, 0
    %p110 = por %p108, %p109
    %p111 = scmp.le.s32.totalorder 1, %s9
    %p112 = scmp.lt.s32.totalorder %s9, 3
    %p113 = pnand %p111, %p112
    %p114 = pneg %p113
    // Predicated region
    $region9: #{encode_text.9} parent=5 // pred_check
      _
    $region10: #{encode_text.9} parent=5 // pred_check_branch
      %116 = sbr.rel (%p113) target = $region12
    $region11: #{encode_text.9} parent=5 // pred_region
      %s117 = ssub.s32 %s9, 1
      // Predicated region
      $region13: #{encode_text.9} parent=11 // pred_check
        %p118 = pneg %p56
      $region14: #{encode_text.9} parent=11 // pred_check_branch
        %120 = sbr.rel (%p118) target = $region16
      $region15: #{encode_text.9} parent=11 // pred_region
        _
      $region16: #{encode_text.9} parent=11 // pred_fallthru
        _
      // Predicated region
      $region17: #{encode_text.9} parent=11 // pred_check
        %p121 = pneg %p77
      $region18: #{encode_text.9} parent=11 // pred_check_branch
        %123 = sbr.rel (%p121) target = $region20
      $region19: #{encode_text.9} parent=11 // pred_region
        _
      $region20: #{encode_text.9} parent=11 // pred_fallthru
        _
    $region12: #{encode_text.9} parent=5 // pred_fallthru
      _
    %p124 = scmp.lt.s32.totalorder %s9, 2
    // Predicated region
    $region21: #{encode_text.9} parent=5 // pred_check
      %p125 = pneg %p124
    $region22: #{encode_text.9} parent=5 // pred_check_branch
      %127 = sbr.rel (%p125) target = $region24
    $region23: #{encode_text.9} parent=5 // pred_region
      // Predicated region
      $region25: #{encode_text.9} parent=23 // pred_check
        %p128 = pneg %p29
      $region26: #{encode_text.9} parent=23 // pred_check_branch
        %130 = sbr.rel (%p128) target = $region28
      $region27: #{encode_text.9} parent=23 // pred_region
        %p131 = scmp.lt.s32.totalorder %s9, 1
        %s132 = scalar_select %p131, %s9, 1
        %s133 = smul.addr %s132, 8
        %s134 = scalar_lea.vmem %s0, %s133
      $region28: #{encode_text.9} parent=23 // pred_fallthru
        _
    $region24: #{encode_text.9} parent=5 // pred_fallthru
      _
    %p135 = scmp.le.s32.totalorder 1, %s9
    %p136 = scmp.lt.s32.totalorder %s9, 3
    %p137 = pnand %p135, %p136
    %p138 = pneg %p137
    // Predicated region
    $region29: #{encode_text.9} parent=5 // pred_check
      _
    $region30: #{encode_text.9} parent=5 // pred_check_branch
      %140 = sbr.rel (%p137) target = $region32
    $region31: #{encode_text.9} parent=5 // pred_region
      %s141 = ssub.s32 %s9, 1
      %p142 = scmp.lt.s32.totalorder %s14, 1
      %s143 = scalar_select %p142, %s14, 1
      %s144 = smul.addr %s143, 8
      %s145 = scalar_lea.vmem %s0, %s144
      %p146 = pneg %p35
      %p147 = pneg %p32
      %p148 = pneg %p56
      %p149 = pneg %p53
      %p150 = pneg %p77
      %p151 = pneg %p74
      %p152 = pneg %p103
      %p153 = pneg %p100
      %p154 = scmp.lt.s32.totalorder %s14, 1
      %s155 = scalar_select %p154, %s14, 1
      %s156 = smul.addr %s155, 8
      %s157 = scalar_lea.vmem %s3, %s156
      %p158 = scmp.lt.s32.totalorder %s14, 1
      %s159 = scalar_select %p158, %s14, 1
      %s160 = smul.addr %s159, 8
      %s161 = scalar_lea.vmem %s0, %s160
      %p162 = scmp.lt.s32.totalorder %s14, 1
      %s163 = scalar_select %p162, %s14, 1
      %s164 = smul.addr %s163, 8
      %s165 = scalar_lea.vmem %s3, %s164
      %v166 = vld [vmem:[%s161] sm:$0xff]
      %v167 = vld [vmem:[%s1] sm:$0x1]
      %v168 = vld [vmem:[%s2] sm:$0x1]
      %vm169 = vcmask 261120
      %v170 = vsel %vm169, %v166, 0.0
      %171 = vadd.xlane.f32.xlu0 %v170
      %v172 = vpop.xlane.xlu0 %171
      %v173 = vrcp.pop 32.0
      %v174 = vmul.f32 32.0, %v173
      %v175 = vsub.f32 1.0, %v174
      %v176 = vmul.f32 %v173, %v175
      %v177 = vadd.f32 %v173, %v176
      %vm178 = vweird.f32 %v173
      %v179 = vsel %vm178, %v173, %v177
      %v180 = vmul.f32 %v172, %v179
      %v181 = vsub.f32 %v166, %v180
      %v182 = vmul.f32 %v181, %v181
      %v183 = vsel %vm169, %v182, 0.0
      %184 = vadd.xlane.f32.xlu0 %v183
      %v185 = vpop.xlane.xlu0 %184
      %v186 = vmul.f32 %v185, %v179
      %v187 = vadd.f32 %v186, 1e-05
      %v188 = vrsqrt.pop %v187
      %v189 = vmul.f32 %v188, %v187
      %v190 = vmul.f32 %v189, %v188
      %v191 = vmul.f32 0.5, %v190
      %v192 = vsub.f32 1.5, %v191
      %v193 = vmul.f32 %v188, %v192
      %vm194 = vweird.f32 %v187
      %vm195 = vweird.f32 %v188
      %vm196 = vmor %vm194, %vm195
      %v197 = vsel %vm196, %v188, %v193
      %v198 = vmul.f32 %v181, %v197
      %v200 = vperm.slane %v167, 0
      %v202 = vmul.f32 %v198, %v200
      %v204 = vperm.slane %v168, 0
      %v206 = vadd.f32 %v202, %v204
      %207 = vst.msk [vmem:[%s165] sm:$0xff] %vm169, %v206
      %p208 = scmp.lt.s32.totalorder %s14, 1
      %s209 = scalar_select %p208, %s14, 1
      %s210 = smul.addr %s209, 8
      %s211 = scalar_lea.vmem %s3, %s210
      // Predicated region
      $region33: #{encode_text.9} parent=31 // pred_check
        %p212 = pneg %p100
      $region34: #{encode_text.9} parent=31 // pred_check_branch
        %214 = sbr.rel (%p212) target = $region36
      $region35: #{encode_text.9} parent=31 // pred_region
        _
      $region36: #{encode_text.9} parent=31 // pred_fallthru
        _
    $region32: #{encode_text.9} parent=5 // pred_fallthru
      _
    %p215 = scmp.le.s32.totalorder 2, %s9
    // Predicated region
    $region37: #{encode_text.9} parent=5 // pred_check
      %p216 = pneg %p215
    $region38: #{encode_text.9} parent=5 // pred_check_branch
      %218 = sbr.rel (%p216) target = $region40
    $region39: #{encode_text.9} parent=5 // pred_region
      %s219 = ssub.s32 %s9, 2
      // Predicated region
      $region41: #{encode_text.9} parent=39 // pred_check
        %p220 = pneg %p106
      $region42: #{encode_text.9} parent=39 // pred_check_branch
        %222 = sbr.rel (%p220) target = $region44
      $region43: #{encode_text.9} parent=39 // pred_region
        %p223 = scmp.lt.s32.totalorder %s15, 1
        %s224 = scalar_select %p223, %s15, 1
        %s225 = smul.addr %s224, 8
        %s226 = scalar_lea.vmem %s3, %s225
      $region44: #{encode_text.9} parent=39 // pred_fallthru
        _
    $region40: #{encode_text.9} parent=5 // pred_fallthru
      _
  $region6: #{encode_text.9} parent=0 // loop_footer
    %s13 = sadd.s32 1, %s9
  $region7: #{encode_text.9} parent=0 // loop_footer_branch
    %8 = sbr.rel target = $region3
  $region8: #{encode_text.9} parent=0 // loop_exit
    _

// kernel: encode_text.6
$region0: #{encode_text.6}
  #allocation0 [shape = 'u32[]', space=smem, size = 0x4, offset = 0x4, fixed_abs, tag = 'smem constant byte address 0x4 - core index']
  #allocation1 [shape = 'u32[72,128]{1,0:T(1,128)}', space=vmem, size = 0x9000, scoped, tag = 'internal scratch']
  %s0 = inlined_call_operand.vmem [shape: f32[16,32], index: 0, kind: input, shape index: {}]
  %s1 = inlined_call_operand.vmem [shape: f32[1,32], index: 1, kind: input, shape index: {}]
  %s2 = inlined_call_operand.vmem [shape: f32[1,32], index: 2, kind: input, shape index: {}]
  %s3 = inlined_call_operand.vmem [shape: f32[32,128], index: 3, kind: input, shape index: {}]
  %s4 = inlined_call_operand.vmem [shape: f32[1,128], index: 4, kind: input, shape index: {}]
  %s5 = inlined_call_operand.vmem [shape: f32[128,32], index: 5, kind: input, shape index: {}]
  %s6 = inlined_call_operand.vmem [shape: f32[1,32], index: 6, kind: input, shape index: {}]
  %s7 = inlined_call_operand.vmem [shape: f32[16,32], index: 7, kind: output, shape index: {}]
  %s8 = sld [smem:[#allocation0]]
  $region61: #{encode_text.6} parent=0
    _
  %s10 = ssub.s32 1, %s8
  %s11 = scalar_select 0, %s10, %s8
  loop: start=0, step=1, limit=4
  $region2: #{encode_text.6} parent=0 // loop_pre_header
    _
  $region3: #{encode_text.6} parent=0 // loop_header
    %s13 = sphi 0, %s17
    %p14 = scmp.ge.s32.totalorder %s13, 4
    %s23 = sphi 0, %s25
    %s26 = sphi 0, %s23
    %s27 = sphi 0, %s26
    %s43 = sphi 0, %s27
    %s47 = sphi 0, %s47
    %s49 = sphi 0, %s47
    %s50 = sphi 0, %s49
    %s64 = sphi 0, %s50
    %s68 = sphi 0, %s68
    %s70 = sphi 0, %s68
    %s71 = sphi 0, %s70
    %s85 = sphi 0, %s71
    %s89 = sphi 0, %s89
    %s91 = sphi 0, %s89
    %s92 = sphi 0, %s91
    %s106 = sphi 0, %s92
    %s110 = sphi 0, %s110
    %s112 = sphi 0, %s110
    %s113 = sphi 0, %s112
    %s127 = sphi 0, %s113
    %s131 = sphi 0, %s131
    %s133 = sphi 0, %s131
    %s134 = sphi 0, %s133
    %s148 = sphi 0, %s134
    %s152 = sphi 0, %s152
    %s154 = sphi 0, %s152
    %s155 = sphi 0, %s154
    %s169 = sphi 0, %s155
    %s175 = sphi 0, %s177
    %s178 = sphi 0, %s175
    %s179 = sphi 0, %s178
    %s195 = sphi 0, %s179
  $region4: #{encode_text.6} parent=0 // loop_header_branch
    %16 = sbr.rel (%p14) target = $region8
  $region5: #{encode_text.6} parent=0 // loop_body
    %s18 = ssub.s32 %s13, 1
    %s19 = ssub.s32 %s13, 2
    %s20 = sadd.s32 %s13, 1
    %s21 = ssub.s32 %s13, %s20
    %p22 = scmp.eq.s32.totalorder %s21, 0
    %s24 = sadd.s32 %s23, 1
    %s25 = scalar_select %p22, %s23, %s24
    %p28 = pneg %p22
    %p29 = scmp.eq.s32.totalorder %s13, 1
    %p30 = por %p28, %p29
    %p31 = scmp.ne.s32.totalorder %s23, %s26
    %p32 = scmp.eq.s32.totalorder %s13, 0
    %p33 = por %p31, %p32
    %p34 = scmp.ne.s32.totalorder %s23, %s26
    %p35 = scmp.eq.s32.totalorder %s18, 1
    %p36 = por %p34, %p35
    %p37 = scmp.ne.s32.totalorder %s26, %s27
    %p38 = scmp.eq.s32.totalorder %s18, 0
    %p39 = por %p37, %p38
    %p40 = scmp.ne.s32.totalorder %s26, %s27
    %p41 = scmp.eq.s32.totalorder %s19, 1
    %p42 = por %p40, %p41
    %p44 = scmp.ne.s32.totalorder %s27, %s43
    %p45 = scmp.eq.s32.totalorder %s19, 0
    %p46 = por %p44, %p45
    %s48 = sadd.s32 %s47, 1
    %p51 = scmp.eq.s32.totalorder %s13, 1
    %p52 = scmp.ne.s32.totalorder %s47, %s49
    %p53 = scmp.eq.s32.totalorder %s13, 0
    %p54 = por %p52, %p53
    %p55 = scmp.ne.s32.totalorder %s47, %s49
    %p56 = scmp.eq.s32.totalorder %s18, 1
    %p57 = por %p55, %p56
    %p58 = scmp.ne.s32.totalorder %s49, %s50
    %p59 = scmp.eq.s32.totalorder %s18, 0
    %p60 = por %p58, %p59
    %p61 = scmp.ne.s32.totalorder %s49, %s50
    %p62 = scmp.eq.s32.totalorder %s19, 1
    %p63 = por %p61, %p62
    %p65 = scmp.ne.s32.totalorder %s50, %s64
    %p66 = scmp.eq.s32.totalorder %s19, 0
    %p67 = por %p65, %p66
    %s69 = sadd.s32 %s68, 1
    %p72 = scmp.eq.s32.totalorder %s13, 1
    %p73 = scmp.ne.s32.totalorder %s68, %s70
    %p74 = scmp.eq.s32.totalorder %s13, 0
    %p75 = por %p73, %p74
    %p76 = scmp.ne.s32.totalorder %s68, %s70
    %p77 = scmp.eq.s32.totalorder %s18, 1
    %p78 = por %p76, %p77
    %p79 = scmp.ne.s32.totalorder %s70, %s71
    %p80 = scmp.eq.s32.totalorder %s18, 0
    %p81 = por %p79, %p80
    %p82 = scmp.ne.s32.totalorder %s70, %s71
    %p83 = scmp.eq.s32.totalorder %s19, 1
    %p84 = por %p82, %p83
    %p86 = scmp.ne.s32.totalorder %s71, %s85
    %p87 = scmp.eq.s32.totalorder %s19, 0
    %p88 = por %p86, %p87
    %s90 = sadd.s32 %s89, 1
    %p93 = scmp.eq.s32.totalorder %s13, 1
    %p94 = scmp.ne.s32.totalorder %s89, %s91
    %p95 = scmp.eq.s32.totalorder %s13, 0
    %p96 = por %p94, %p95
    %p97 = scmp.ne.s32.totalorder %s89, %s91
    %p98 = scmp.eq.s32.totalorder %s18, 1
    %p99 = por %p97, %p98
    %p100 = scmp.ne.s32.totalorder %s91, %s92
    %p101 = scmp.eq.s32.totalorder %s18, 0
    %p102 = por %p100, %p101
    %p103 = scmp.ne.s32.totalorder %s91, %s92
    %p104 = scmp.eq.s32.totalorder %s19, 1
    %p105 = por %p103, %p104
    %p107 = scmp.ne.s32.totalorder %s92, %s106
    %p108 = scmp.eq.s32.totalorder %s19, 0
    %p109 = por %p107, %p108
    %s111 = sadd.s32 %s110, 1
    %p114 = scmp.eq.s32.totalorder %s13, 1
    %p115 = scmp.ne.s32.totalorder %s110, %s112
    %p116 = scmp.eq.s32.totalorder %s13, 0
    %p117 = por %p115, %p116
    %p118 = scmp.ne.s32.totalorder %s110, %s112
    %p119 = scmp.eq.s32.totalorder %s18, 1
    %p120 = por %p118, %p119
    %p121 = scmp.ne.s32.totalorder %s112, %s113
    %p122 = scmp.eq.s32.totalorder %s18, 0
    %p123 = por %p121, %p122
    %p124 = scmp.ne.s32.totalorder %s112, %s113
    %p125 = scmp.eq.s32.totalorder %s19, 1
    %p126 = por %p124, %p125
    %p128 = scmp.ne.s32.totalorder %s113, %s127
    %p129 = scmp.eq.s32.totalorder %s19, 0
    %p130 = por %p128, %p129
    %s132 = sadd.s32 %s131, 1
    %p135 = scmp.eq.s32.totalorder %s13, 1
    %p136 = scmp.ne.s32.totalorder %s131, %s133
    %p137 = scmp.eq.s32.totalorder %s13, 0
    %p138 = por %p136, %p137
    %p139 = scmp.ne.s32.totalorder %s131, %s133
    %p140 = scmp.eq.s32.totalorder %s18, 1
    %p141 = por %p139, %p140
    %p142 = scmp.ne.s32.totalorder %s133, %s134
    %p143 = scmp.eq.s32.totalorder %s18, 0
    %p144 = por %p142, %p143
    %p145 = scmp.ne.s32.totalorder %s133, %s134
    %p146 = scmp.eq.s32.totalorder %s19, 1
    %p147 = por %p145, %p146
    %p149 = scmp.ne.s32.totalorder %s134, %s148
    %p150 = scmp.eq.s32.totalorder %s19, 0
    %p151 = por %p149, %p150
    %s153 = sadd.s32 %s152, 1
    %p156 = scmp.eq.s32.totalorder %s13, 1
    %p157 = scmp.ne.s32.totalorder %s152, %s154
    %p158 = scmp.eq.s32.totalorder %s13, 0
    %p159 = por %p157, %p158
    %p160 = scmp.ne.s32.totalorder %s152, %s154
    %p161 = scmp.eq.s32.totalorder %s18, 1
    %p162 = por %p160, %p161
    %p163 = scmp.ne.s32.totalorder %s154, %s155
    %p164 = scmp.eq.s32.totalorder %s18, 0
    %p165 = por %p163, %p164
    %p166 = scmp.ne.s32.totalorder %s154, %s155
    %p167 = scmp.eq.s32.totalorder %s19, 1
    %p168 = por %p166, %p167
    %p170 = scmp.ne.s32.totalorder %s155, %s169
    %p171 = scmp.eq.s32.totalorder %s19, 0
    %p172 = por %p170, %p171
    %s173 = ssub.s32 %s13, %s20
    %p174 = scmp.eq.s32.totalorder %s173, 0
    %s176 = sadd.s32 %s175, 1
    %s177 = scalar_select %p174, %s175, %s176
    %p180 = pneg %p174
    %p181 = scmp.eq.s32.totalorder %s13, 1
    %p182 = por %p180, %p181
    %p183 = scmp.ne.s32.totalorder %s175, %s178
    %p184 = scmp.eq.s32.totalorder %s13, 0
    %p185 = por %p183, %p184
    %p186 = scmp.ne.s32.totalorder %s175, %s178
    %p187 = scmp.eq.s32.totalorder %s18, 1
    %p188 = por %p186, %p187
    %p189 = scmp.ne.s32.totalorder %s178, %s179
    %p190 = scmp.eq.s32.totalorder %s18, 0
    %p191 = por %p189, %p190
    %p192 = scmp.ne.s32.totalorder %s178, %s179
    %p193 = scmp.eq.s32.totalorder %s19, 1
    %p194 = por %p192, %p193
    %p196 = scmp.ne.s32.totalorder %s179, %s195
    %p197 = scmp.eq.s32.totalorder %s19, 0
    %p198 = por %p196, %p197
    %p199 = scmp.le.s32.totalorder 1, %s13
    %p200 = scmp.lt.s32.totalorder %s13, 3
    %p201 = pnand %p199, %p200
    %p202 = pneg %p201
    // Predicated region
    $region9: #{encode_text.6} parent=5 // pred_check
      _
    $region10: #{encode_text.6} parent=5 // pred_check_branch
      %204 = sbr.rel (%p201) target = $region12
    $region11: #{encode_text.6} parent=5 // pred_region
      %s205 = ssub.s32 %s13, 1
      // Predicated region
      $region13: #{encode_text.6} parent=11 // pred_check
        %p206 = pneg %p60
      $region14: #{encode_text.6} parent=11 // pred_check_branch
        %208 = sbr.rel (%p206) target = $region16
      $region15: #{encode_text.6} parent=11 // pred_region
        _
      $region16: #{encode_text.6} parent=11 // pred_fallthru
        _
      // Predicated region
      $region17: #{encode_text.6} parent=11 // pred_check
        %p209 = pneg %p81
      $region18: #{encode_text.6} parent=11 // pred_check_branch
        %211 = sbr.rel (%p209) target = $region20
      $region19: #{encode_text.6} parent=11 // pred_region
        _
      $region20: #{encode_text.6} parent=11 // pred_fallthru
        _
      // Predicated region
      $region21: #{encode_text.6} parent=11 // pred_check
        %p212 = pneg %p102
      $region22: #{encode_text.6} parent=11 // pred_check_branch
        %214 = sbr.rel (%p212) target = $region24
      $region23: #{encode_text.6} parent=11 // pred_region
        _
      $region24: #{encode_text.6} parent=11 // pred_fallthru
        _
      // Predicated region
      $region25: #{encode_text.6} parent=11 // pred_check
        %p215 = pneg %p123
      $region26: #{encode_text.6} parent=11 // pred_check_branch
        %217 = sbr.rel (%p215) target = $region28
      $region27: #{encode_text.6} parent=11 // pred_region
        _
      $region28: #{encode_text.6} parent=11 // pred_fallthru
        _
      // Predicated region
      $region29: #{encode_text.6} parent=11 // pred_check
        %p218 = pneg %p144
      $region30: #{encode_text.6} parent=11 // pred_check_branch
        %220 = sbr.rel (%p218) target = $region32
      $region31: #{encode_text.6} parent=11 // pred_region
        _
      $region32: #{encode_text.6} parent=11 // pred_fallthru
        _
      // Predicated region
      $region33: #{encode_text.6} parent=11 // pred_check
        %p221 = pneg %p165
      $region34: #{encode_text.6} parent=11 // pred_check_branch
        %223 = sbr.rel (%p221) target = $region36
      $region35: #{encode_text.6} parent=11 // pred_region
        _
      $region36: #{encode_text.6} parent=11 // pred_fallthru
        _
    $region12: #{encode_text.6} parent=5 // pred_fallthru
      _
    %p224 = scmp.lt.s32.totalorder %s13, 2
    // Predicated region
    $region37: #{encode_text.6} parent=5 // pred_check
      %p225 = pneg %p224
    $region38: #{encode_text.6} parent=5 // pred_check_branch
      %227 = sbr.rel (%p225) target = $region40
    $region39: #{encode_text.6} parent=5 // pred_region
      // Predicated region
      $region41: #{encode_text.6} parent=39 // pred_check
        %p228 = pneg %p33
      $region42: #{encode_text.6} parent=39 // pred_check_branch
        %230 = sbr.rel (%p228) target = $region44
      $region43: #{encode_text.6} parent=39 // pred_region
        %p231 = scmp.lt.s32.totalorder %s13, 1
        %s232 = scalar_select %p231, %s13, 1
        %s233 = smul.addr %s232, 8
        %s234 = scalar_lea.vmem %s0, %s233
      $region44: #{encode_text.6} parent=39 // pred_fallthru
        _
    $region40: #{encode_text.6} parent=5 // pred_fallthru
      _
    %p235 = scmp.le.s32.totalorder 1, %s13
    %p236 = scmp.lt.s32.totalorder %s13, 3
    %p237 = pnand %p235, %p236
    %p238 = pneg %p237
    // Predicated region
    $region45: #{encode_text.6} parent=5 // pred_check
      _
    $region46: #{encode_text.6} parent=5 // pred_check_branch
      %240 = sbr.rel (%p237) target = $region48
    $region47: #{encode_text.6} parent=5 // pred_region
      %s241 = ssub.s32 %s13, 1
      %p242 = scmp.lt.s32.totalorder %s18, 1
      %s243 = scalar_select %p242, %s18, 1
      %s244 = smul.addr %s243, 8
      %s245 = scalar_lea.vmem %s0, %s244
      %p246 = pneg %p39
      %p247 = pneg %p36
      %p248 = pneg %p60
      %p249 = pneg %p57
      %p250 = pneg %p81
      %p251 = pneg %p78
      %p252 = pneg %p102
      %p253 = pneg %p99
      %p254 = pneg %p123
      %p255 = pneg %p120
      %p256 = pneg %p144
      %p257 = pneg %p141
      %p258 = pneg %p165
      %p259 = pneg %p162
      %p260 = pneg %p191
      %p261 = pneg %p188
      %p262 = scmp.lt.s32.totalorder %s18, 1
      %s263 = scalar_select %p262, %s18, 1
      %s264 = smul.addr %s263, 8
      %s265 = scalar_lea.vmem %s7, %s264
      %p266 = scmp.lt.s32.totalorder %s18, 1
      %s267 = scalar_select %p266, %s18, 1
      %s268 = smul.addr %s267, 8
      %s269 = scalar_lea.vmem %s0, %s268
      %p270 = scmp.lt.s32.totalorder %s18, 1
      %s271 = scalar_select %p270, %s18, 1
      %s272 = smul.addr %s271, 8
      %s273 = scalar_lea.vmem %s7, %s272
      %v274 = vld [vmem:[%s269] sm:$0xff]
      %v275 = vld [vmem:[%s1] sm:$0x1]
      %v276 = vld [vmem:[%s2] sm:$0x1]
      %vm277 = vcmask 261120
      %v278 = vsel %vm277, %v274, 0.0
      %279 = vadd.xlane.f32.xlu0 %v278
      %v280 = vpop.xlane.xlu0 %279
      %v281 = vrcp.pop 32.0
      %v282 = vmul.f32 32.0, %v281
      %v283 = vsub.f32 1.0, %v282
      %v284 = vmul.f32 %v281, %v283
      %v285 = vadd.f32 %v281, %v284
      %vm286 = vweird.f32 %v281
      %v287 = vsel %vm286, %v281, %v285
      %v288 = vmul.f32 %v280, %v287
      %v289 = vsub.f32 %v274, %v288
      %v290 = vmul.f32 %v289, %v289
      %v291 = vsel %vm277, %v290, 0.0
      %292 = vadd.xlane.f32.xlu0 %v291
      %v293 = vpop.xlane.xlu0 %292
      %v294 = vmul.f32 %v293, %v287
      %v295 = vadd.f32 %v294, 1e-05
      %v296 = vrsqrt.pop %v295
      %v297 = vmul.f32 %v296, %v295
      %v298 = vmul.f32 %v297, %v296
      %v299 = vmul.f32 0.5, %v298
      %v300 = vsub.f32 1.5, %v299
      %v301 = vmul.f32 %v296, %v300
      %vm302 = vweird.f32 %v295
      %vm303 = vweird.f32 %v296
      %vm304 = vmor %vm302, %vm303
      %v305 = vsel %vm304, %v296, %v301
      %v306 = vmul.f32 %v289, %v305
      %v308 = vperm.slane %v275, 0
      %v310 = vmul.f32 %v306, %v308
      %v312 = vperm.slane %v276, 0
      %v314 = vadd.f32 %v310, %v312
      %v315 = vld [vmem:[%s3] sm:$0xff]
      %v316 = vld [vmem:[%s3 + $0x8] sm:$0xff]
      %v317 = vld [vmem:[%s3 + $0x10] sm:$0xff]
      %v318 = vld [vmem:[%s3 + $0x18] sm:$0xff]
      %v319 = vld [vmem:[%s4] sm:$0x1]
      %v321 = vperm.slane %v319, 0
      %v324 = vsel %vm277, %v314, 0
      %326 = vmatpush.msra.mxu0 0.0
      %327 = vmatpush.msra.mxu0 0.0
      %328 = vmatpush.msra.mxu0 0.0
      %329 = vmatpush.msra.mxu0 0.0
      %330 = vmatpush.msra.mxu0 0.0
      %331 = vmatpush.msra.mxu0 0.0
      %332 = vmatpush.msra.mxu0 0.0
      %333 = vmatpush.msra.mxu0 0.0
      %334 = vmatpush.msra.mxu0 0.0
      %335 = vmatpush.msra.mxu0 0.0
      %336 = vmatpush.msra.mxu0 0.0
      %337 = vmatpush.msra.mxu0 0.0
      %338 = vmatpush.msra.mxu0 %v318
      %339 = vmatpush.msra.mxu0 %v317
      %340 = vmatpush.msra.mxu0 %v316
      %341 = vmatpush.msra.mxu0 %v315
      %342 = vmatmul.f32.gmra.mxu0 %v324
      %v343 = vpop.f32.mrf.mxu0
      %v344 = vadd.f32 %v321, %v343
      %345 = vdwg.mxu0
      %v346 = vmul.f32 %v344, 0.5
      %v347 = vmul.f32 %v344, 0.70710677
      %vm348 = vcmp.ge.f32.partialorder %v347, 0.0
      %v349 = vsel %vm348, 1.0, -1.0
      %v350 = vand.u32 2147483647, %v347
      %v351 = vmul.f32 %v350, 0.3275911
      %v352 = vadd.f32 %v351, 1.0
      %v353 = vrcp.pop %v352
      %v354 = vmul.f32 %v352, %v353
      %v355 = vsub.f32 1.0, %v354
      %v356 = vmul.f32 %v353, %v355
      %v357 = vadd.f32 %v353, %v356
      %vm358 = vweird.f32 %v352
      %vm359 = vweird.f32 %v353
      %vm360 = vmor %vm358, %vm359
      %v361 = vsel %vm360, %v353, %v357
      %v362 = vand.u32 2147483647, %v352
      %vm363 = vcmp.eq.f32.partialorder %v362, 8.507059e+37
      %v364 = vand.u32 %v352, 2147483648
      %v365 = vor.u32 1.1754944e-38, %v364
      %v366 = vsel %vm363, %v365, %v361
      %v367 = vmul.f32 1.0, %v366
      %v368 = vmul.f32 %v367, 1.0614054
      %v369 = vadd.f32 %v368, -1.4531521
      %v370 = vmul.f32 %v369, %v367
      %v371 = vadd.f32 %v370, 1.4214138
      %v372 = vmul.f32 %v371, %v367
      %v373 = vadd.f32 %v372, -0.28449672
      %v374 = vmul.f32 %v373, %v367
      %v375 = vadd.f32 %v374, 0.2548296
      %v376 = vmul.f32 %v375, %v367
      %v377 = vsub.f32 0.0, %v350
      %v378 = vmul.f32 %v377, %v350
      %v379 = vmul.f32 %v378, 1.442695
      %v380 = vpow.pop %v379
      %v381 = vmul.f32 %v376, %v380
      %v382 = vsub.f32 1.0, %v381
      %v383 = vmul.f32 %v349, %v382
      %v384 = vadd.f32 %v383, 1.0
      %v385 = vmul.f32 %v346, %v384
      %v386 = vld [vmem:[%s5] sm:$0xff]
      %v387 = vld [vmem:[%s5 + $0x8] sm:$0xff]
      %v388 = vld [vmem:[%s5 + $0x10] sm:$0xff]
      %v389 = vld [vmem:[%s5 + $0x18] sm:$0xff]
      %v390 = vld [vmem:[%s5 + $0x20] sm:$0xff]
      %v391 = vld [vmem:[%s5 + $0x28] sm:$0xff]
      %v392 = vld [vmem:[%s5 + $0x30] sm:$0xff]
      %v393 = vld [vmem:[%s5 + $0x38] sm:$0xff]
      %v394 = vld [vmem:[%s5 + $0x40] sm:$0xff]
      %v395 = vld [vmem:[%s5 + $0x48] sm:$0xff]
      %v396 = vld [vmem:[%s5 + $0x50] sm:$0xff]
      %v397 = vld [vmem:[%s5 + $0x58] sm:$0xff]
      %v398 = vld [vmem:[%s5 + $0x60] sm:$0xff]
      %v399 = vld [vmem:[%s5 + $0x68] sm:$0xff]
      %v400 = vld [vmem:[%s5 + $0x70] sm:$0xff]
      %v401 = vld [vmem:[%s5 + $0x78] sm:$0xff]
      %v402 = vld [vmem:[%s6] sm:$0x1]
      %v404 = vperm.slane %v402, 0
      %406 = vmatpush.msra.mxu0 %v401
      %407 = vmatpush.msra.mxu0 %v400
      %408 = vmatpush.msra.mxu0 %v399
      %409 = vmatpush.msra.mxu0 %v398
      %410 = vmatpush.msra.mxu0 %v397
      %411 = vmatpush.msra.mxu0 %v396
      %412 = vmatpush.msra.mxu0 %v395
      %413 = vmatpush.msra.mxu0 %v394
      %414 = vmatpush.msra.mxu0 %v393
      %415 = vmatpush.msra.mxu0 %v392
      %416 = vmatpush.msra.mxu0 %v391
      %417 = vmatpush.msra.mxu0 %v390
      %418 = vmatpush.msra.mxu0 %v389
      %419 = vmatpush.msra.mxu0 %v388
      %420 = vmatpush.msra.mxu0 %v387
      %421 = vmatpush.msra.mxu0 %v386
      %422 = vmatmul.f32.gmra.mxu0 %v385
      %v423 = vpop.f32.mrf.mxu0
      %v424 = vadd.f32 %v404, %v423
      %425 = vdwg.mxu0
      %v426 = vadd.f32 %v274, %v424
      %427 = vst.msk [vmem:[%s273] sm:$0xff] %vm277, %v426
      %p428 = scmp.lt.s32.totalorder %s18, 1
      %s429 = scalar_select %p428, %s18, 1
      %s430 = smul.addr %s429, 8
      %s431 = scalar_lea.vmem %s7, %s430
      // Predicated region
      $region49: #{encode_text.6} parent=47 // pred_check
        %p432 = pneg %p188
      $region50: #{encode_text.6} parent=47 // pred_check_branch
        %434 = sbr.rel (%p432) target = $region52
      $region51: #{encode_text.6} parent=47 // pred_region
        _
      $region52: #{encode_text.6} parent=47 // pred_fallthru
        _
    $region48: #{encode_text.6} parent=5 // pred_fallthru
      _
    %p435 = scmp.le.s32.totalorder 2, %s13
    // Predicated region
    $region53: #{encode_text.6} parent=5 // pred_check
      %p436 = pneg %p435
    $region54: #{encode_text.6} parent=5 // pred_check_branch
      %438 = sbr.rel (%p436) target = $region56
    $region55: #{encode_text.6} parent=5 // pred_region
      %s439 = ssub.s32 %s13, 2
      // Predicated region
      $region57: #{encode_text.6} parent=55 // pred_check
        %p440 = pneg %p194
      $region58: #{encode_text.6} parent=55 // pred_check_branch
        %442 = sbr.rel (%p440) target = $region60
      $region59: #{encode_text.6} parent=55 // pred_region
        %p443 = scmp.lt.s32.totalorder %s19, 1
        %s444 = scalar_select %p443, %s19, 1
        %s445 = smul.addr %s444, 8
        %s446 = scalar_lea.vmem %s7, %s445
      $region60: #{encode_text.6} parent=55 // pred_fallthru
        _
    $region56: #{encode_text.6} parent=5 // pred_fallthru
      _
  $region6: #{encode_text.6} parent=0 // loop_footer
    %s17 = sadd.s32 1, %s13
  $region7: #{encode_text.6} parent=0 // loop_footer_branch
    %12 = sbr.rel target = $region3
  $region8: #{encode_text.6} parent=0 // loop_exit
    _

// kernel: encode_text.5
$region0: #{encode_text.5}
  #allocation0 [shape = 'u32[]', space=smem, size = 0x4, offset = 0x4, fixed_abs, tag = 'smem constant byte address 0x4 - core index']
  #allocation1 [shape = 'u32[72,128]{1,0:T(1,128)}', space=vmem, size = 0x9000, scoped, tag = 'internal scratch']
  %s0 = inlined_call_operand.vmem [shape: f32[2,8,32], index: 0, kind: input, shape index: {}]
  %s1 = inlined_call_operand.vmem [shape: f32[1,32], index: 1, kind: input, shape index: {}]
  %s2 = inlined_call_operand.vmem [shape: f32[1,32], index: 2, kind: input, shape index: {}]
  %s3 = inlined_call_operand.vmem [shape: f32[4,32,8], index: 3, kind: input, shape index: {}]
  %s4 = inlined_call_operand.vmem [shape: f32[4,1,8], index: 4, kind: input, shape index: {}]
  %s5 = inlined_call_operand.vmem [shape: f32[4,32,8], index: 5, kind: input, shape index: {}]
  %s6 = inlined_call_operand.vmem [shape: f32[4,1,8], index: 6, kind: input, shape index: {}]
  %s7 = inlined_call_operand.vmem [shape: f32[4,32,8], index: 7, kind: input, shape index: {}]
  %s8 = inlined_call_operand.vmem [shape: f32[4,1,8], index: 8, kind: input, shape index: {}]
  %s9 = inlined_call_operand.vmem [shape: f32[4,8,32], index: 9, kind: input, shape index: {}]
  %s10 = inlined_call_operand.vmem [shape: f32[1,32], index: 10, kind: input, shape index: {}]
  %s11 = inlined_call_operand.vmem [shape: f32[2,8,32], index: 11, kind: output, shape index: {}]
  %s12 = sld [smem:[#allocation0]]
  $region77: #{encode_text.5} parent=0
    _
  %s14 = ssub.s32 1, %s12
  %s15 = scalar_select 0, %s14, %s12
  loop: start=0, step=1, limit=4
  $region2: #{encode_text.5} parent=0 // loop_pre_header
    _
  $region3: #{encode_text.5} parent=0 // loop_header
    %s17 = sphi 0, %s21
    %p18 = scmp.ge.s32.totalorder %s17, 4
    %s27 = sphi 0, %s29
    %s30 = sphi 0, %s27
    %s31 = sphi 0, %s30
    %s47 = sphi 0, %s31
    %s51 = sphi 0, %s51
    %s53 = sphi 0, %s51
    %s54 = sphi 0, %s53
    %s68 = sphi 0, %s54
    %s72 = sphi 0, %s72
    %s74 = sphi 0, %s72
    %s75 = sphi 0, %s74
    %s89 = sphi 0, %s75
    %s93 = sphi 0, %s93
    %s95 = sphi 0, %s93
    %s96 = sphi 0, %s95
    %s110 = sphi 0, %s96
    %s114 = sphi 0, %s114
    %s116 = sphi 0, %s114
    %s117 = sphi 0, %s116
    %s131 = sphi 0, %s117
    %s135 = sphi 0, %s135
    %s137 = sphi 0, %s135
    %s138 = sphi 0, %s137
    %s152 = sphi 0, %s138
    %s156 = sphi 0, %s156
    %s158 = sphi 0, %s156
    %s159 = sphi 0, %s158
    %s173 = sphi 0, %s159
    %s177 = sphi 0, %s177
    %s179 = sphi 0, %s177
    %s180 = sphi 0, %s179
    %s194 = sphi 0, %s180
    %s198 = sphi 0, %s198
    %s200 = sphi 0, %s198
    %s201 = sphi 0, %s200
    %s215 = sphi 0, %s201
    %s219 = sphi 0, %s219
    %s221 = sphi 0, %s219
    %s222 = sphi 0, %s221
    %s236 = sphi 0, %s222
    %s240 = sphi 0, %s240
    %s242 = sphi 0, %s240
    %s243 = sphi 0, %s242
    %s257 = sphi 0, %s243
    %s263 = sphi 0, %s265
    %s266 = sphi 0, %s263
    %s267 = sphi 0, %s266
    %s283 = sphi 0, %s267
  $region4: #{encode_text.5} parent=0 // loop_header_branch
    %20 = sbr.rel (%p18) target = $region8
  $region5: #{encode_text.5} parent=0 // loop_body
    %s22 = ssub.s32 %s17, 1
    %s23 = ssub.s32 %s17, 2
    %s24 = sadd.s32 %s17, 1
    %s25 = ssub.s32 %s17, %s24
    %p26 = scmp.eq.s32.totalorder %s25, 0
    %s28 = sadd.s32 %s27, 1
    %s29 = scalar_select %p26, %s27, %s28
    %p32 = pneg %p26
    %p33 = scmp.eq.s32.totalorder %s17, 1
    %p34 = por %p32, %p33
    %p35 = scmp.ne.s32.totalorder %s27, %s30
    %p36 = scmp.eq.s32.totalorder %s17, 0
    %p37 = por %p35, %p36
    %p38 = scmp.ne.s32.totalorder %s27, %s30
    %p39 = scmp.eq.s32.totalorder %s22, 1
    %p40 = por %p38, %p39
    %p41 = scmp.ne.s32.totalorder %s30, %s31
    %p42 = scmp.eq.s32.totalorder %s22, 0
    %p43 = por %p41, %p42
    %p44 = scmp.ne.s32.totalorder %s30, %s31
    %p45 = scmp.eq.s32.totalorder %s23, 1
    %p46 = por %p44, %p45
    %p48 = scmp.ne.s32.totalorder %s31, %s47
    %p49 = scmp.eq.s32.totalorder %s23, 0
    %p50 = por %p48, %p49
    %s52 = sadd.s32 %s51, 1
    %p55 = scmp.eq.s32.totalorder %s17, 1
    %p56 = scmp.ne.s32.totalorder %s51, %s53
    %p57 = scmp.eq.s32.totalorder %s17, 0
    %p58 = por %p56, %p57
    %p59 = scmp.ne.s32.totalorder %s51, %s53
    %p60 = scmp.eq.s32.totalorder %s22, 1
    %p61 = por %p59, %p60
    %p62 = scmp.ne.s32.totalorder %s53, %s54
    %p63 = scmp.eq.s32.totalorder %s22, 0
    %p64 = por %p62, %p63
    %p65 = scmp.ne.s32.totalorder %s53, %s54
    %p66 = scmp.eq.s32.totalorder %s23, 1
    %p67 = por %p65, %p66
    %p69 = scmp.ne.s32.totalorder %s54, %s68
    %p70 = scmp.eq.s32.totalorder %s23, 0
    %p71 = por %p69, %p70
    %s73 = sadd.s32 %s72, 1
    %p76 = scmp.eq.s32.totalorder %s17, 1
    %p77 = scmp.ne.s32.totalorder %s72, %s74
    %p78 = scmp.eq.s32.totalorder %s17, 0
    %p79 = por %p77, %p78
    %p80 = scmp.ne.s32.totalorder %s72, %s74
    %p81 = scmp.eq.s32.totalorder %s22, 1
    %p82 = por %p80, %p81
    %p83 = scmp.ne.s32.totalorder %s74, %s75
    %p84 = scmp.eq.s32.totalorder %s22, 0
    %p85 = por %p83, %p84
    %p86 = scmp.ne.s32.totalorder %s74, %s75
    %p87 = scmp.eq.s32.totalorder %s23, 1
    %p88 = por %p86, %p87
    %p90 = scmp.ne.s32.totalorder %s75, %s89
    %p91 = scmp.eq.s32.totalorder %s23, 0
    %p92 = por %p90, %p91
    %s94 = sadd.s32 %s93, 1
    %p97 = scmp.eq.s32.totalorder %s17, 1
    %p98 = scmp.ne.s32.totalorder %s93, %s95
    %p99 = scmp.eq.s32.totalorder %s17, 0
    %p100 = por %p98, %p99
    %p101 = scmp.ne.s32.totalorder %s93, %s95
    %p102 = scmp.eq.s32.totalorder %s22, 1
    %p103 = por %p101, %p102
    %p104 = scmp.ne.s32.totalorder %s95, %s96
    %p105 = scmp.eq.s32.totalorder %s22, 0
    %p106 = por %p104, %p105
    %p107 = scmp.ne.s32.totalorder %s95, %s96
    %p108 = scmp.eq.s32.totalorder %s23, 1
    %p109 = por %p107, %p108
    %p111 = scmp.ne.s32.totalorder %s96, %s110
    %p112 = scmp.eq.s32.totalorder %s23, 0
    %p113 = por %p111, %p112
    %s115 = sadd.s32 %s114, 1
    %p118 = scmp.eq.s32.totalorder %s17, 1
    %p119 = scmp.ne.s32.totalorder %s114, %s116
    %p120 = scmp.eq.s32.totalorder %s17, 0
    %p121 = por %p119, %p120
    %p122 = scmp.ne.s32.totalorder %s114, %s116
    %p123 = scmp.eq.s32.totalorder %s22, 1
    %p124 = por %p122, %p123
    %p125 = scmp.ne.s32.totalorder %s116, %s117
    %p126 = scmp.eq.s32.totalorder %s22, 0
    %p127 = por %p125, %p126
    %p128 = scmp.ne.s32.totalorder %s116, %s117
    %p129 = scmp.eq.s32.totalorder %s23, 1
    %p130 = por %p128, %p129
    %p132 = scmp.ne.s32.totalorder %s117, %s131
    %p133 = scmp.eq.s32.totalorder %s23, 0
    %p134 = por %p132, %p133
    %s136 = sadd.s32 %s135, 1
    %p139 = scmp.eq.s32.totalorder %s17, 1
    %p140 = scmp.ne.s32.totalorder %s135, %s137
    %p141 = scmp.eq.s32.totalorder %s17, 0
    %p142 = por %p140, %p141
    %p143 = scmp.ne.s32.totalorder %s135, %s137
    %p144 = scmp.eq.s32.totalorder %s22, 1
    %p145 = por %p143, %p144
    %p146 = scmp.ne.s32.totalorder %s137, %s138
    %p147 = scmp.eq.s32.totalorder %s22, 0
    %p148 = por %p146, %p147
    %p149 = scmp.ne.s32.totalorder %s137, %s138
    %p150 = scmp.eq.s32.totalorder %s23, 1
    %p151 = por %p149, %p150
    %p153 = scmp.ne.s32.totalorder %s138, %s152
    %p154 = scmp.eq.s32.totalorder %s23, 0
    %p155 = por %p153, %p154
    %s157 = sadd.s32 %s156, 1
    %p160 = scmp.eq.s32.totalorder %s17, 1
    %p161 = scmp.ne.s32.totalorder %s156, %s158
    %p162 = scmp.eq.s32.totalorder %s17, 0
    %p163 = por %p161, %p162
    %p164 = scmp.ne.s32.totalorder %s156, %s158
    %p165 = scmp.eq.s32.totalorder %s22, 1
    %p166 = por %p164, %p165
    %p167 = scmp.ne.s32.totalorder %s158, %s159
    %p168 = scmp.eq.s32.totalorder %s22, 0
    %p169 = por %p167, %p168
    %p170 = scmp.ne.s32.totalorder %s158, %s159
    %p171 = scmp.eq.s32.totalorder %s23, 1
    %p172 = por %p170, %p171
    %p174 = scmp.ne.s32.totalorder %s159, %s173
    %p175 = scmp.eq.s32.totalorder %s23, 0
    %p176 = por %p174, %p175
    %s178 = sadd.s32 %s177, 1
    %p181 = scmp.eq.s32.totalorder %s17, 1
    %p182 = scmp.ne.s32.totalorder %s177, %s179
    %p183 = scmp.eq.s32.totalorder %s17, 0
    %p184 = por %p182, %p183
    %p185 = scmp.ne.s32.totalorder %s177, %s179
    %p186 = scmp.eq.s32.totalorder %s22, 1
    %p187 = por %p185, %p186
    %p188 = scmp.ne.s32.totalorder %s179, %s180
    %p189 = scmp.eq.s32.totalorder %s22, 0
    %p190 = por %p188, %p189
    %p191 = scmp.ne.s32.totalorder %s179, %s180
    %p192 = scmp.eq.s32.totalorder %s23, 1
    %p193 = por %p191, %p192
    %p195 = scmp.ne.s32.totalorder %s180, %s194
    %p196 = scmp.eq.s32.totalorder %s23, 0
    %p197 = por %p195, %p196
    %s199 = sadd.s32 %s198, 1
    %p202 = scmp.eq.s32.totalorder %s17, 1
    %p203 = scmp.ne.s32.totalorder %s198, %s200
    %p204 = scmp.eq.s32.totalorder %s17, 0
    %p205 = por %p203, %p204
    %p206 = scmp.ne.s32.totalorder %s198, %s200
    %p207 = scmp.eq.s32.totalorder %s22, 1
    %p208 = por %p206, %p207
    %p209 = scmp.ne.s32.totalorder %s200, %s201
    %p210 = scmp.eq.s32.totalorder %s22, 0
    %p211 = por %p209, %p210
    %p212 = scmp.ne.s32.totalorder %s200, %s201
    %p213 = scmp.eq.s32.totalorder %s23, 1
    %p214 = por %p212, %p213
    %p216 = scmp.ne.s32.totalorder %s201, %s215
    %p217 = scmp.eq.s32.totalorder %s23, 0
    %p218 = por %p216, %p217
    %s220 = sadd.s32 %s219, 1
    %p223 = scmp.eq.s32.totalorder %s17, 1
    %p224 = scmp.ne.s32.totalorder %s219, %s221
    %p225 = scmp.eq.s32.totalorder %s17, 0
    %p226 = por %p224, %p225
    %p227 = scmp.ne.s32.totalorder %s219, %s221
    %p228 = scmp.eq.s32.totalorder %s22, 1
    %p229 = por %p227, %p228
    %p230 = scmp.ne.s32.totalorder %s221, %s222
    %p231 = scmp.eq.s32.totalorder %s22, 0
    %p232 = por %p230, %p231
    %p233 = scmp.ne.s32.totalorder %s221, %s222
    %p234 = scmp.eq.s32.totalorder %s23, 1
    %p235 = por %p233, %p234
    %p237 = scmp.ne.s32.totalorder %s222, %s236
    %p238 = scmp.eq.s32.totalorder %s23, 0
    %p239 = por %p237, %p238
    %s241 = sadd.s32 %s240, 1
    %p244 = scmp.eq.s32.totalorder %s17, 1
    %p245 = scmp.ne.s32.totalorder %s240, %s242
    %p246 = scmp.eq.s32.totalorder %s17, 0
    %p247 = por %p245, %p246
    %p248 = scmp.ne.s32.totalorder %s240, %s242
    %p249 = scmp.eq.s32.totalorder %s22, 1
    %p250 = por %p248, %p249
    %p251 = scmp.ne.s32.totalorder %s242, %s243
    %p252 = scmp.eq.s32.totalorder %s22, 0
    %p253 = por %p251, %p252
    %p254 = scmp.ne.s32.totalorder %s242, %s243
    %p255 = scmp.eq.s32.totalorder %s23, 1
    %p256 = por %p254, %p255
    %p258 = scmp.ne.s32.totalorder %s243, %s257
    %p259 = scmp.eq.s32.totalorder %s23, 0
    %p260 = por %p258, %p259
    %s261 = ssub.s32 %s17, %s24
    %p262 = scmp.eq.s32.totalorder %s261, 0
    %s264 = sadd.s32 %s263, 1
    %s265 = scalar_select %p262, %s263, %s264
    %p268 = pneg %p262
    %p269 = scmp.eq.s32.totalorder %s17, 1
    %p270 = por %p268, %p269
    %p271 = scmp.ne.s32.totalorder %s263, %s266
    %p272 = scmp.eq.s32.totalorder %s17, 0
    %p273 = por %p271, %p272
    %p274 = scmp.ne.s32.totalorder %s263, %s266
    %p275 = scmp.eq.s32.totalorder %s22, 1
    %p276 = por %p274, %p275
    %p277 = scmp.ne.s32.totalorder %s266, %s267
    %p278 = scmp.eq.s32.totalorder %s22, 0
    %p279 = por %p277, %p278
    %p280 = scmp.ne.s32.totalorder %s266, %s267
    %p281 = scmp.eq.s32.totalorder %s23, 1
    %p282 = por %p280, %p281
    %p284 = scmp.ne.s32.totalorder %s267, %s283
    %p285 = scmp.eq.s32.totalorder %s23, 0
    %p286 = por %p284, %p285
    %p287 = scmp.le.s32.totalorder 1, %s17
    %p288 = scmp.lt.s32.totalorder %s17, 3
    %p289 = pnand %p287, %p288
    %p290 = pneg %p289
    // Predicated region
    $region9: #{encode_text.5} parent=5 // pred_check
      _
    $region10: #{encode_text.5} parent=5 // pred_check_branch
      %292 = sbr.rel (%p289) target = $region12
    $region11: #{encode_text.5} parent=5 // pred_region
      %s293 = ssub.s32 %s17, 1
      // Predicated region
      $region13: #{encode_text.5} parent=11 // pred_check
        %p294 = pneg %p64
      $region14: #{encode_text.5} parent=11 // pred_check_branch
        %296 = sbr.rel (%p294) target = $region16
      $region15: #{encode_text.5} parent=11 // pred_region
        _
      $region16: #{encode_text.5} parent=11 // pred_fallthru
        _
      // Predicated region
      $region17: #{encode_text.5} parent=11 // pred_check
        %p297 = pneg %p85
      $region18: #{encode_text.5} parent=11 // pred_check_branch
        %299 = sbr.rel (%p297) target = $region20
      $region19: #{encode_text.5} parent=11 // pred_region
        _
      $region20: #{encode_text.5} parent=11 // pred_fallthru
        _
      // Predicated region
      $region21: #{encode_text.5} parent=11 // pred_check
        %p300 = pneg %p106
      $region22: #{encode_text.5} parent=11 // pred_check_branch
        %302 = sbr.rel (%p300) target = $region24
      $region23: #{encode_text.5} parent=11 // pred_region
        _
      $region24: #{encode_text.5} parent=11 // pred_fallthru
        _
      // Predicated region
      $region25: #{encode_text.5} parent=11 // pred_check
        %p303 = pneg %p127
      $region26: #{encode_text.5} parent=11 // pred_check_branch
        %305 = sbr.rel (%p303) target = $region28
      $region27: #{encode_text.5} parent=11 // pred_region
        _
      $region28: #{encode_text.5} parent=11 // pred_fallthru
        _
      // Predicated region
      $region29: #{encode_text.5} parent=11 // pred_check
        %p306 = pneg %p148
      $region30: #{encode_text.5} parent=11 // pred_check_branch
        %308 = sbr.rel (%p306) target = $region32
      $region31: #{encode_text.5} parent=11 // pred_region
        _
      $region32: #{encode_text.5} parent=11 // pred_fallthru
        _
      // Predicated region
      $region33: #{encode_text.5} parent=11 // pred_check
        %p309 = pneg %p169
      $region34: #{encode_text.5} parent=11 // pred_check_branch
        %311 = sbr.rel (%p309) target = $region36
      $region35: #{encode_text.5} parent=11 // pred_region
        _
      $region36: #{encode_text.5} parent=11 // pred_fallthru
        _
      // Predicated region
      $region37: #{encode_text.5} parent=11 // pred_check
        %p312 = pneg %p190
      $region38: #{encode_text.5} parent=11 // pred_check_branch
        %314 = sbr.rel (%p312) target = $region40
      $region39: #{encode_text.5} parent=11 // pred_region
        _
      $region40: #{encode_text.5} parent=11 // pred_fallthru
        _
      // Predicated region
      $region41: #{encode_text.5} parent=11 // pred_check
        %p315 = pneg %p211
      $region42: #{encode_text.5} parent=11 // pred_check_branch
        %317 = sbr.rel (%p315) target = $region44
      $region43: #{encode_text.5} parent=11 // pred_region
        _
      $region44: #{encode_text.5} parent=11 // pred_fallthru
        _
      // Predicated region
      $region45: #{encode_text.5} parent=11 // pred_check
        %p318 = pneg %p232
      $region46: #{encode_text.5} parent=11 // pred_check_branch
        %320 = sbr.rel (%p318) target = $region48
      $region47: #{encode_text.5} parent=11 // pred_region
        _
      $region48: #{encode_text.5} parent=11 // pred_fallthru
        _
      // Predicated region
      $region49: #{encode_text.5} parent=11 // pred_check
        %p321 = pneg %p253
      $region50: #{encode_text.5} parent=11 // pred_check_branch
        %323 = sbr.rel (%p321) target = $region52
      $region51: #{encode_text.5} parent=11 // pred_region
        _
      $region52: #{encode_text.5} parent=11 // pred_fallthru
        _
    $region12: #{encode_text.5} parent=5 // pred_fallthru
      _
    %p324 = scmp.lt.s32.totalorder %s17, 2
    // Predicated region
    $region53: #{encode_text.5} parent=5 // pred_check
      %p325 = pneg %p324
    $region54: #{encode_text.5} parent=5 // pred_check_branch
      %327 = sbr.rel (%p325) target = $region56
    $region55: #{encode_text.5} parent=5 // pred_region
      // Predicated region
      $region57: #{encode_text.5} parent=55 // pred_check
        %p328 = pneg %p37
      $region58: #{encode_text.5} parent=55 // pred_check_branch
        %330 = sbr.rel (%p328) target = $region60
      $region59: #{encode_text.5} parent=55 // pred_region
        %p331 = scmp.lt.s32.totalorder %s17, 1
        %s332 = scalar_select %p331, %s17, 1
        %s333 = smul.addr %s332, 8
        %s334 = scalar_lea.vmem %s0, %s333
      $region60: #{encode_text.5} parent=55 // pred_fallthru
        _
    $region56: #{encode_text.5} parent=5 // pred_fallthru
      _
    %p335 = scmp.le.s32.totalorder 1, %s17
    %p336 = scmp.lt.s32.totalorder %s17, 3
    %p337 = pnand %p335, %p336
    %p338 = pneg %p337
    // Predicated region
    $region61: #{encode_text.5} parent=5 // pred_check
      _
    $region62: #{encode_text.5} parent=5 // pred_check_branch
      %340 = sbr.rel (%p337) target = $region64
    $region63: #{encode_text.5} parent=5 // pred_region
      %s341 = ssub.s32 %s17, 1
      %p342 = scmp.lt.s32.totalorder %s22, 1
      %s343 = scalar_select %p342, %s22, 1
      %s344 = smul.addr %s343, 8
      %s345 = scalar_lea.vmem %s0, %s344
      %p346 = pneg %p43
      %p347 = pneg %p40
      %p348 = pneg %p64
      %p349 = pneg %p61
      %p350 = pneg %p85
      %p351 = pneg %p82
      %p352 = pneg %p106
      %p353 = pneg %p103
      %p354 = pneg %p127
      %p355 = pneg %p124
      %p356 = pneg %p148
      %p357 = pneg %p145
      %p358 = pneg %p169
      %p359 = pneg %p166
      %p360 = pneg %p190
      %p361 = pneg %p187
      %p362 = pneg %p211
      %p363 = pneg %p208
      %p364 = pneg %p232
      %p365 = pneg %p229
      %p366 = pneg %p253
      %p367 = pneg %p250
      %p368 = pneg %p279
      %p369 = pneg %p276
      %p370 = scmp.lt.s32.totalorder %s22, 1
      %s371 = scalar_select %p370, %s22, 1
      %s372 = smul.addr %s371, 8
      %s373 = scalar_lea.vmem %s11, %s372
      %p374 = scmp.lt.s32.totalorder %s22, 1
      %s375 = scalar_select %p374, %s22, 1
      %s376 = smul.addr %s375, 8
      %s377 = scalar_lea.vmem %s0, %s376
      %p378 = scmp.lt.s32.totalorder %s22, 1
      %s379 = scalar_select %p378, %s22, 1
      %s380 = smul.addr %s379, 8
      %s381 = scalar_lea.vmem %s11, %s380
      %v382 = vld [vmem:[%s377] sm:$0xff]
      %v383 = vld [vmem:[%s1] sm:$0x1]
      %v384 = vld [vmem:[%s2] sm:$0x1]
      %vm385 = vcmask 261120
      %v386 = vsel %vm385, %v382, 0.0
      %387 = vadd.xlane.f32.xlu0 %v386
      %v388 = vpop.xlane.xlu0 %387
      %v389 = vrcp.pop 32.0
      %v390 = vmul.f32 32.0, %v389
      %v391 = vsub.f32 1.0, %v390
      %v392 = vmul.f32 %v389, %v391
      %v393 = vadd.f32 %v389, %v392
      %vm394 = vweird.f32 %v389
      %v395 = vsel %vm394, %v389, %v393
      %v396 = vmul.f32 %v388, %v395
      %v397 = vsub.f32 %v382, %v396
      %v398 = vmul.f32 %v397, %v397
      %v399 = vsel %vm385, %v398, 0.0
      %400 = vadd.xlane.f32.xlu0 %v399
      %v401 = vpop.xlane.xlu0 %400
      %v402 = vmul.f32 %v401, %v395
      %v403 = vadd.f32 %v402, 1e-05
      %v404 = vrsqrt.pop %v403
      %v405 = vmul.f32 %v404, %v403
      %v406 = vmul.f32 %v405, %v404
      %v407 = vmul.f32 0.5, %v406
      %v408 = vsub.f32 1.5, %v407
      %v409 = vmul.f32 %v404, %v408
      %vm410 = vweird.f32 %v403
      %vm411 = vweird.f32 %v404
      %vm412 = vmor %vm410, %vm411
      %v413 = vsel %vm412, %v404, %v409
      %v414 = vmul.f32 %v397, %v413
      %v416 = vperm.slane %v383, 0
      %v418 = vmul.f32 %v414, %v416
      %v420 = vperm.slane %v384, 0
      %v422 = vadd.f32 %v418, %v420
      %v423 = vlaneseq
      %v424 = vshrl.u32 %v423, 7
      %v425 = vlaneseq
      %v426 = vand.u32 %v425, 127
      %vm427 = vcmp.le.s32.totalorder %v426, %v424
      %v428 = vld [vmem:[%s3] sm:$0xff]
      %v429 = vld [vmem:[%s3 + $0x8] sm:$0xff]
      %v430 = vld [vmem:[%s3 + $0x10] sm:$0xff]
      %v431 = vld [vmem:[%s3 + $0x18] sm:$0xff]
      %v432 = vld [vmem:[%s4] sm:$0x1]
      %v434 = vperm.slane %v432, 0
      %v437 = vsel %vm385, %v422, 0
      %439 = vmatpush.msra.mxu0 0.0
      %440 = vmatpush.msra.mxu0 0.0
      %441 = vmatpush.msra.mxu0 0.0
      %442 = vmatpush.msra.mxu0 0.0
      %443 = vmatpush.msra.mxu0 0.0
      %444 = vmatpush.msra.mxu0 0.0
      %445 = vmatpush.msra.mxu0 0.0
      %446 = vmatpush.msra.mxu0 0.0
      %447 = vmatpush.msra.mxu0 0.0
      %448 = vmatpush.msra.mxu0 0.0
      %449 = vmatpush.msra.mxu0 0.0
      %450 = vmatpush.msra.mxu0 0.0
      %451 = vmatpush.msra.mxu0 %v431
      %452 = vmatpush.msra.mxu0 %v430
      %453 = vmatpush.msra.mxu0 %v429
      %454 = vmatpush.msra.mxu0 %v428
      %455 = vmatmul.f32.gmra.mxu0 %v437
      %v456 = vpop.f32.mrf.mxu0
      %v457 = vadd.f32 %v434, %v456
      %458 = vdwg.mxu0
      %v459 = vld [vmem:[%s5] sm:$0xff]
      %v460 = vld [vmem:[%s5 + $0x8] sm:$0xff]
      %v461 = vld [vmem:[%s5 + $0x10] sm:$0xff]
      %v462 = vld [vmem:[%s5 + $0x18] sm:$0xff]
      %v463 = vld [vmem:[%s6] sm:$0x1]
      %v465 = vperm.slane %v463, 0
      %467 = vmatpush.msra.mxu0 0.0
      %468 = vmatpush.msra.mxu0 0.0
      %469 = vmatpush.msra.mxu0 0.0
      %470 = vmatpush.msra.mxu0 0.0
      %471 = vmatpush.msra.mxu0 0.0
      %472 = vmatpush.msra.mxu0 0.0
      %473 = vmatpush.msra.mxu0 0.0
      %474 = vmatpush.msra.mxu0 0.0
      %475 = vmatpush.msra.mxu0 0.0
      %476 = vmatpush.msra.mxu0 0.0
      %477 = vmatpush.msra.mxu0 0.0
      %478 = vmatpush.msra.mxu0 0.0
      %479 = vmatpush.msra.mxu0 %v462
      %480 = vmatpush.msra.mxu0 %v461
      %481 = vmatpush.msra.mxu0 %v460
      %482 = vmatpush.msra.mxu0 %v459
      %483 = vmatmul.f32.gmra.mxu0 %v437
      %v484 = vpop.f32.mrf.mxu0
      %v485 = vadd.f32 %v465, %v484
      %486 = vdwg.mxu0
      %v487 = vld [vmem:[%s7] sm:$0xff]
      %v488 = vld [vmem:[%s7 + $0x8] sm:$0xff]
      %v489 = vld [vmem:[%s7 + $0x10] sm:$0xff]
      %v490 = vld [vmem:[%s7 + $0x18] sm:$0xff]
      %v491 = vld [vmem:[%s8] sm:$0x1]
      %v493 = vperm.slane %v491, 0
      %495 = vmatpush.msra.mxu0 0.0
      %496 = vmatpush.msra.mxu0 0.0
      %497 = vmatpush.msra.mxu0 0.0
      %498 = vmatpush.msra.mxu0 0.0
      %499 = vmatpush.msra.mxu0 0.0
      %500 = vmatpush.msra.mxu0 0.0
      %501 = vmatpush.msra.mxu0 0.0
      %502 = vmatpush.msra.mxu0 0.0
      %503 = vmatpush.msra.mxu0 0.0
      %504 = vmatpush.msra.mxu0 0.0
      %505 = vmatpush.msra.mxu0 0.0
      %506 = vmatpush.msra.mxu0 0.0
      %507 = vmatpush.msra.mxu0 %v490
      %508 = vmatpush.msra.mxu0 %v489
      %509 = vmatpush.msra.mxu0 %v488
      %510 = vmatpush.msra.mxu0 %v487
      %511 = vmatmul.f32.gmra.mxu0 %v437
      %v512 = vpop.f32.mrf.mxu0
      %v513 = vadd.f32 %v493, %v512
      %514 = vdwg.mxu0
      %vm515 = vcmask 64512
      %v517 = vsel %vm515, %v457, 0
      %v520 = vsel %vm515, %v485, 0
      %522 = vmatpush.xpose.msra.mxu0 0.0
      %523 = vmatpush.xpose.msra.mxu0 0.0
      %524 = vmatpush.xpose.msra.mxu0 0.0
      %525 = vmatpush.xpose.msra.mxu0 0.0
      %526 = vmatpush.xpose.msra.mxu0 0.0
      %527 = vmatpush.xpose.msra.mxu0 0.0
      %528 = vmatpush.xpose.msra.mxu0 0.0
      %529 = vmatpush.xpose.msra.mxu0 0.0
      %530 = vmatpush.xpose.msra.mxu0 0.0
      %531 = vmatpush.xpose.msra.mxu0 0.0
      %532 = vmatpush.xpose.msra.mxu0 0.0
      %533 = vmatpush.xpose.msra.mxu0 0.0
      %534 = vmatpush.xpose.msra.mxu0 0.0
      %535 = vmatpush.xpose.msra.mxu0 0.0
      %536 = vmatpush.xpose.msra.mxu0 0.0
      %537 = vmatpush.xpose.msra.mxu0 %v520
      %538 = vmatmul.f32.gmra.mxu0 %v517
      %v539 = vpop.f32.mrf.mxu0
      %v540 = vadd.f32 0.0, %v539
      %541 = vdwg.mxu0
      %v542 = vsel %vm427, %v540, -1e+30
      %v543 = vsel %vm515, %v542, -inf
      %544 = vmax.xlane.f32.xlu0 %v543
      %v545 = vpop.xlane.xlu0 %544
      %v546 = vsub.f32 %v542, %v545
      %v547 = vmul.f32 %v546, 1.442695
      %v548 = vpow.pop %v547
      %v549 = vsel %vm515, %v548, 0.0
      %550 = vadd.xlane.f32.xlu0 %v549
      %v551 = vpop.xlane.xlu0 %550
      %v552 = vrcp.pop %v551
      %v553 = vmul.f32 %v548, %v552
      %v555 = vsel %vm515, %v553, 0
      %557 = vmatpush.msra.mxu0 0.0
      %558 = vmatpush.msra.mxu0 0.0
      %559 = vmatpush.msra.mxu0 0.0
      %560 = vmatpush.msra.mxu0 0.0
      %561 = vmatpush.msra.mxu0 0.0
      %562 = vmatpush.msra.mxu0 0.0
      %563 = vmatpush.msra.mxu0 0.0
      %564 = vmatpush.msra.mxu0 0.0
      %565 = vmatpush.msra.mxu0 0.0
      %566 = vmatpush.msra.mxu0 0.0
      %567 = vmatpush.msra.mxu0 0.0
      %568 = vmatpush.msra.mxu0 0.0
      %569 = vmatpush.msra.mxu0 0.0
      %570 = vmatpush.msra.mxu0 0.0
      %571 = vmatpush.msra.mxu0 0.0
      %572 = vmatpush.msra.mxu0 %v513
      %573 = vmatmul.f32.gmra.mxu0 %v555
      %v574 = vpop.f32.mrf.mxu0
      %v575 = vadd.f32 0.0, %v574
      %576 = vdwg.mxu0
      %v577 = vld [vmem:[%s9] sm:$0xff]
      %s578 = scalar_lea.vmem %s3, 32
      %v579 = vld [vmem:[%s578] sm:$0xff]
      %v580 = vld [vmem:[%s578 + $0x8] sm:$0xff]
      %v581 = vld [vmem:[%s578 + $0x10] sm:$0xff]
      %v582 = vld [vmem:[%s578 + $0x18] sm:$0xff]
      %s583 = scalar_lea.vmem %s4, 1
      %v584 = vld [vmem:[%s583] sm:$0x1]
      %v586 = vperm.slane %v584, 0
      %588 = vmatpush.msra.mxu0 0.0
      %589 = vmatpush.msra.mxu0 0.0
      %590 = vmatpush.msra.mxu0 0.0
      %591 = vmatpush.msra.mxu0 0.0
      %592 = vmatpush.msra.mxu0 0.0
      %593 = vmatpush.msra.mxu0 0.0
      %594 = vmatpush.msra.mxu0 0.0
      %595 = vmatpush.msra.mxu0 0.0
      %596 = vmatpush.msra.mxu0 0.0
      %597 = vmatpush.msra.mxu0 0.0
      %598 = vmatpush.msra.mxu0 0.0
      %599 = vmatpush.msra.mxu0 0.0
      %600 = vmatpush.msra.mxu0 %v582
      %601 = vmatpush.msra.mxu0 %v581
      %602 = vmatpush.msra.mxu0 %v580
      %603 = vmatpush.msra.mxu0 %v579
      %604 = vmatmul.f32.gmra.mxu0 %v437
      %v605 = vpop.f32.mrf.mxu0
      %v606 = vadd.f32 %v586, %v605
      %607 = vdwg.mxu0
      %s608 = scalar_lea.vmem %s5, 32
      %v609 = vld [vmem:[%s608] sm:$0xff]
      %v610 = vld [vmem:[%s608 + $0x8] sm:$0xff]
      %v611 = vld [vmem:[%s608 + $0x10] sm:$0xff]
      %v612 = vld [vmem:[%s608 + $0x18] sm:$0xff]
      %s613 = scalar_lea.vmem %s6, 1
      %v614 = vld [vmem:[%s613] sm:$0x1]
      %v616 = vperm.slane %v614, 0
      %618 = vmatpush.msra.mxu0 0.0
      %619 = vmatpush.msra.mxu0 0.0
      %620 = vmatpush.msra.mxu0 0.0
      %621 = vmatpush.msra.mxu0 0.0
      %622 = vmatpush.msra.mxu0 0.0
      %623 = vmatpush.msra.mxu0 0.0
      %624 = vmatpush.msra.mxu0 0.0
      %625 = vmatpush.msra.mxu0 0.0
      %626 = vmatpush.msra.mxu0 0.0
      %627 = vmatpush.msra.mxu0 0.0
      %628 = vmatpush.msra.mxu0 0.0
      %629 = vmatpush.msra.mxu0 0.0
      %630 = vmatpush.msra.mxu0 %v612
      %631 = vmatpush.msra.mxu0 %v611
      %632 = vmatpush.msra.mxu0 %v610
      %633 = vmatpush.msra.mxu0 %v609
      %634 = vmatmul.f32.gmra.mxu0 %v437
      %v635 = vpop.f32.mrf.mxu0
      %v636 = vadd.f32 %v616, %v635
      %637 = vdwg.mxu0
      %s638 = scalar_lea.vmem %s7, 32
      %v639 = vld [vmem:[%s638] sm:$0xff]
      %v640 = vld [vmem:[%s638 + $0x8] sm:$0xff]
      %v641 = vld [vmem:[%s638 + $0x10] sm:$0xff]
      %v642 = vld [vmem:[%s638 + $0x18] sm:$0xff]
      %s643 = scalar_lea.vmem %s8, 1
      %v644 = vld [vmem:[%s643] sm:$0x1]
      %v646 = vperm.slane %v644, 0
      %648 = vmatpush.msra.mxu0 0.0
      %649 = vmatpush.msra.mxu0 0.0
      %650 = vmatpush.msra.mxu0 0.0
      %651 = vmatpush.msra.mxu0 0.0
      %652 = vmatpush.msra.mxu0 0.0
      %653 = vmatpush.msra.mxu0 0.0
      %654 = vmatpush.msra.mxu0 0.0
      %655 = vmatpush.msra.mxu0 0.0
      %656 = vmatpush.msra.mxu0 0.0
      %657 = vmatpush.msra.mxu0 0.0
      %658 = vmatpush.msra.mxu0 0.0
      %659 = vmatpush.msra.mxu0 0.0
      %660 = vmatpush.msra.mxu0 %v642
      %661 = vmatpush.msra.mxu0 %v641
      %662 = vmatpush.msra.mxu0 %v640
      %663 = vmatpush.msra.mxu0 %v639
      %664 = vmatmul.f32.gmra.mxu0 %v437
      %v665 = vpop.f32.mrf.mxu0
      %v666 = vadd.f32 %v646, %v665
      %667 = vdwg.mxu0
      %v669 = vsel %vm515, %v606, 0
      %v672 = vsel %vm515, %v636, 0
      %674 = vmatpush.xpose.msra.mxu0 0.0
      %675 = vmatpush.xpose.msra.mxu0 0.0
      %676 = vmatpush.xpose.msra.mxu0 0.0
      %677 = vmatpush.xpose.msra.mxu0 0.0
      %678 = vmatpush.xpose.msra.mxu0 0.0
      %679 = vmatpush.xpose.msra.mxu0 0.0
      %680 = vmatpush.xpose.msra.mxu0 0.0
      %681 = vmatpush.xpose.msra.mxu0 0.0
      %682 = vmatpush.xpose.msra.mxu0 0.0
      %683 = vmatpush.xpose.msra.mxu0 0.0
      %684 = vmatpush.xpose.msra.mxu0 0.0
      %685 = vmatpush.xpose.msra.mxu0 0.0
      %686 = vmatpush.xpose.msra.mxu0 0.0
      %687 = vmatpush.xpose.msra.mxu0 0.0
      %688 = vmatpush.xpose.msra.mxu0 0.0
      %689 = vmatpush.xpose.msra.mxu0 %v672
      %690 = vmatmul.f32.gmra.mxu0 %v669
      %v691 = vpop.f32.mrf.mxu0
      %v692 = vadd.f32 0.0, %v691
      %693 = vdwg.mxu0
      %v694 = vsel %vm427, %v692, -1e+30
      %v695 = vsel %vm515, %v694, -inf
      %696 = vmax.xlane.f32.xlu0 %v695
      %v697 = vpop.xlane.xlu0 %696
      %v698 = vsub.f32 %v694, %v697
      %v699 = vmul.f32 %v698, 1.442695
      %v700 = vpow.pop %v699
      %v701 = vsel %vm515, %v700, 0.0
      %702 = vadd.xlane.f32.xlu0 %v701
      %v703 = vpop.xlane.xlu0 %702
      %v704 = vrcp.pop %v703
      %v705 = vmul.f32 %v700, %v704
      %v707 = vsel %vm515, %v705, 0
      %709 = vmatpush.msra.mxu0 0.0
      %710 = vmatpush.msra.mxu0 0.0
      %711 = vmatpush.msra.mxu0 0.0
      %712 = vmatpush.msra.mxu0 0.0
      %713 = vmatpush.msra.mxu0 0.0
      %714 = vmatpush.msra.mxu0 0.0
      %715 = vmatpush.msra.mxu0 0.0
      %716 = vmatpush.msra.mxu0 0.0
      %717 = vmatpush.msra.mxu0 0.0
      %718 = vmatpush.msra.mxu0 0.0
      %719 = vmatpush.msra.mxu0 0.0
      %720 = vmatpush.msra.mxu0 0.0
      %721 = vmatpush.msra.mxu0 0.0
      %722 = vmatpush.msra.mxu0 0.0
      %723 = vmatpush.msra.mxu0 0.0
      %724 = vmatpush.msra.mxu0 %v666
      %725 = vmatmul.f32.gmra.mxu0 %v707
      %v726 = vpop.f32.mrf.mxu0
      %v727 = vadd.f32 0.0, %v726
      %728 = vdwg.mxu0
      %s729 = scalar_lea.vmem %s9, 8
      %v730 = vld [vmem:[%s729] sm:$0xff]
      %v732 = vsel %vm515, %v727, 0
      %734 = vmatpush.msra.mxu0 0.0
      %735 = vmatpush.msra.mxu0 0.0
      %736 = vmatpush.msra.mxu0 0.0
      %737 = vmatpush.msra.mxu0 0.0
      %738 = vmatpush.msra.mxu0 0.0
      %739 = vmatpush.msra.mxu0 0.0
      %740 = vmatpush.msra.mxu0 0.0
      %741 = vmatpush.msra.mxu0 0.0
      %742 = vmatpush.msra.mxu0 0.0
      %743 = vmatpush.msra.mxu0 0.0
      %744 = vmatpush.msra.mxu0 0.0
      %745 = vmatpush.msra.mxu0 0.0
      %746 = vmatpush.msra.mxu0 0.0
      %747 = vmatpush.msra.mxu0 0.0
      %748 = vmatpush.msra.mxu0 0.0
      %749 = vmatpush.msra.mxu0 %v730
      %750 = vmatmul.f32.gmra.mxu0 %v732
      %v751 = vpop.f32.mrf.mxu0
      %v752 = vadd.f32 0.0, %v751
      %753 = vdwg.mxu0
      %v755 = vsel %vm515, %v575, 0
      %757 = vmatpush.msra.mxu0 0.0
      %758 = vmatpush.msra.mxu0 0.0
      %759 = vmatpush.msra.mxu0 0.0
      %760 = vmatpush.msra.mxu0 0.0
      %761 = vmatpush.msra.mxu0 0.0
      %762 = vmatpush.msra.mxu0 0.0
      %763 = vmatpush.msra.mxu0 0.0
      %764 = vmatpush.msra.mxu0 0.0
      %765 = vmatpush.msra.mxu0 0.0
      %766 = vmatpush.msra.mxu0 0.0
      %767 = vmatpush.msra.mxu0 0.0
      %768 = vmatpush.msra.mxu0 0.0
      %769 = vmatpush.msra.mxu0 0.0
      %770 = vmatpush.msra.mxu0 0.0
      %771 = vmatpush.msra.mxu0 0.0
      %772 = vmatpush.msra.mxu0 %v577
      %773 = vmatmul.f32.gmra.mxu0 %v755
      %v774 = vpop.f32.mrf.mxu0
      %v775 = vadd.f32 %v752, %v774
      %776 = vdwg.mxu0
      %s777 = scalar_lea.vmem %s3, 64
      %v778 = vld [vmem:[%s777] sm:$0xff]
      %v779 = vld [vmem:[%s777 + $0x8] sm:$0xff]
      %v780 = vld [vmem:[%s777 + $0x10] sm:$0xff]
      %v781 = vld [vmem:[%s777 + $0x18] sm:$0xff]
      %s782 = scalar_lea.vmem %s4, 2
      %v783 = vld [vmem:[%s782] sm:$0x1]
      %v785 = vperm.slane %v783, 0
      %787 = vmatpush.msra.mxu0 0.0
      %788 = vmatpush.msra.mxu0 0.0
      %789 = vmatpush.msra.mxu0 0.0
      %790 = vmatpush.msra.mxu0 0.0
      %791 = vmatpush.msra.mxu0 0.0
      %792 = vmatpush.msra.mxu0 0.0
      %793 = vmatpush.msra.mxu0 0.0
      %794 = vmatpush.msra.mxu0 0.0
      %795 = vmatpush.msra.mxu0 0.0
      %796 = vmatpush.msra.mxu0 0.0
      %797 = vmatpush.msra.mxu0 0.0
      %798 = vmatpush.msra.mxu0 0.0
      %799 = vmatpush.msra.mxu0 %v781
      %800 = vmatpush.msra.mxu0 %v780
      %801 = vmatpush.msra.mxu0 %v779
      %802 = vmatpush.msra.mxu0 %v778
      %803 = vmatmul.f32.gmra.mxu0 %v437
      %v804 = vpop.f32.mrf.mxu0
      %v805 = vadd.f32 %v785, %v804
      %806 = vdwg.mxu0
      %s807 = scalar_lea.vmem %s5, 64
      %v808 = vld [vmem:[%s807] sm:$0xff]
      %v809 = vld [vmem:[%s807 + $0x8] sm:$0xff]
      %v810 = vld [vmem:[%s807 + $0x10] sm:$0xff]
      %v811 = vld [vmem:[%s807 + $0x18] sm:$0xff]
      %s812 = scalar_lea.vmem %s6, 2
      %v813 = vld [vmem:[%s812] sm:$0x1]
      %v815 = vperm.slane %v813, 0
      %817 = vmatpush.msra.mxu0 0.0
      %818 = vmatpush.msra.mxu0 0.0
      %819 = vmatpush.msra.mxu0 0.0
      %820 = vmatpush.msra.mxu0 0.0
      %821 = vmatpush.msra.mxu0 0.0
      %822 = vmatpush.msra.mxu0 0.0
      %823 = vmatpush.msra.mxu0 0.0
      %824 = vmatpush.msra.mxu0 0.0
      %825 = vmatpush.msra.mxu0 0.0
      %826 = vmatpush.msra.mxu0 0.0
      %827 = vmatpush.msra.mxu0 0.0
      %828 = vmatpush.msra.mxu0 0.0
      %829 = vmatpush.msra.mxu0 %v811
      %830 = vmatpush.msra.mxu0 %v810
      %831 = vmatpush.msra.mxu0 %v809
      %832 = vmatpush.msra.mxu0 %v808
      %833 = vmatmul.f32.gmra.mxu0 %v437
      %v834 = vpop.f32.mrf.mxu0
      %v835 = vadd.f32 %v815, %v834
      %836 = vdwg.mxu0
      %s837 = scalar_lea.vmem %s7, 64
      %v838 = vld [vmem:[%s837] sm:$0xff]
      %v839 = vld [vmem:[%s837 + $0x8] sm:$0xff]
      %v840 = vld [vmem:[%s837 + $0x10] sm:$0xff]
      %v841 = vld [vmem:[%s837 + $0x18] sm:$0xff]
      %s842 = scalar_lea.vmem %s8, 2
      %v843 = vld [vmem:[%s842] sm:$0x1]
      %v845 = vperm.slane %v843, 0
      %847 = vmatpush.msra.mxu0 0.0
      %848 = vmatpush.msra.mxu0 0.0
      %849 = vmatpush.msra.mxu0 0.0
      %850 = vmatpush.msra.mxu0 0.0
      %851 = vmatpush.msra.mxu0 0.0
      %852 = vmatpush.msra.mxu0 0.0
      %853 = vmatpush.msra.mxu0 0.0
      %854 = vmatpush.msra.mxu0 0.0
      %855 = vmatpush.msra.mxu0 0.0
      %856 = vmatpush.msra.mxu0 0.0
      %857 = vmatpush.msra.mxu0 0.0
      %858 = vmatpush.msra.mxu0 0.0
      %859 = vmatpush.msra.mxu0 %v841
      %860 = vmatpush.msra.mxu0 %v840
      %861 = vmatpush.msra.mxu0 %v839
      %862 = vmatpush.msra.mxu0 %v838
      %863 = vmatmul.f32.gmra.mxu0 %v437
      %v864 = vpop.f32.mrf.mxu0
      %v865 = vadd.f32 %v845, %v864
      %866 = vdwg.mxu0
      %v868 = vsel %vm515, %v805, 0
      %v871 = vsel %vm515, %v835, 0
      %873 = vmatpush.xpose.msra.mxu0 0.0
      %874 = vmatpush.xpose.msra.mxu0 0.0
      %875 = vmatpush.xpose.msra.mxu0 0.0
      %876 = vmatpush.xpose.msra.mxu0 0.0
      %877 = vmatpush.xpose.msra.mxu0 0.0
      %878 = vmatpush.xpose.msra.mxu0 0.0
      %879 = vmatpush.xpose.msra.mxu0 0.0
      %880 = vmatpush.xpose.msra.mxu0 0.0
      %881 = vmatpush.xpose.msra.mxu0 0.0
      %882 = vmatpush.xpose.msra.mxu0 0.0
      %883 = vmatpush.xpose.msra.mxu0 0.0
      %884 = vmatpush.xpose.msra.mxu0 0.0
      %885 = vmatpush.xpose.msra.mxu0 0.0
      %886 = vmatpush.xpose.msra.mxu0 0.0
      %887 = vmatpush.xpose.msra.mxu0 0.0
      %888 = vmatpush.xpose.msra.mxu0 %v871
      %889 = vmatmul.f32.gmra.mxu0 %v868
      %v890 = vpop.f32.mrf.mxu0
      %v891 = vadd.f32 0.0, %v890
      %892 = vdwg.mxu0
      %v893 = vsel %vm427, %v891, -1e+30
      %v894 = vsel %vm515, %v893, -inf
      %895 = vmax.xlane.f32.xlu0 %v894
      %v896 = vpop.xlane.xlu0 %895
      %v897 = vsub.f32 %v893, %v896
      %v898 = vmul.f32 %v897, 1.442695
      %v899 = vpow.pop %v898
      %v900 = vsel %vm515, %v899, 0.0
      %901 = vadd.xlane.f32.xlu0 %v900
      %v902 = vpop.xlane.xlu0 %901
      %v903 = vrcp.pop %v902
      %v904 = vmul.f32 %v899, %v903
      %v906 = vsel %vm515, %v904, 0
      %908 = vmatpush.msra.mxu0 0.0
      %909 = vmatpush.msra.mxu0 0.0
      %910 = vmatpush.msra.mxu0 0.0
      %911 = vmatpush.msra.mxu0 0.0
      %912 = vmatpush.msra.mxu0 0.0
      %913 = vmatpush.msra.mxu0 0.0
      %914 = vmatpush.msra.mxu0 0.0
      %915 = vmatpush.msra.mxu0 0.0
      %916 = vmatpush.msra.mxu0 0.0
      %917 = vmatpush.msra.mxu0 0.0
      %918 = vmatpush.msra.mxu0 0.0
      %919 = vmatpush.msra.mxu0 0.0
      %920 = vmatpush.msra.mxu0 0.0
      %921 = vmatpush.msra.mxu0 0.0
      %922 = vmatpush.msra.mxu0 0.0
      %923 = vmatpush.msra.mxu0 %v865
      %924 = vmatmul.f32.gmra.mxu0 %v906
      %v925 = vpop.f32.mrf.mxu0
      %v926 = vadd.f32 0.0, %v925
      %927 = vdwg.mxu0
      %s928 = scalar_lea.vmem %s9, 16
      %v929 = vld [vmem:[%s928] sm:$0xff]
      %v931 = vsel %vm515, %v926, 0
      %933 = vmatpush.msra.mxu0 0.0
      %934 = vmatpush.msra.mxu0 0.0
      %935 = vmatpush.msra.mxu0 0.0
      %936 = vmatpush.msra.mxu0 0.0
      %937 = vmatpush.msra.mxu0 0.0
      %938 = vmatpush.msra.mxu0 0.0
      %939 = vmatpush.msra.mxu0 0.0
      %940 = vmatpush.msra.mxu0 0.0
      %941 = vmatpush.msra.mxu0 0.0
      %942 = vmatpush.msra.mxu0 0.0
      %943 = vmatpush.msra.mxu0 0.0
      %944 = vmatpush.msra.mxu0 0.0
      %945 = vmatpush.msra.mxu0 0.0
      %946 = vmatpush.msra.mxu0 0.0
      %947 = vmatpush.msra.mxu0 0.0
      %948 = vmatpush.msra.mxu0 %v929
      %949 = vmatmul.f32.gmra.mxu0 %v931
      %v950 = vpop.f32.mrf.mxu0
      %v951 = vadd.f32 0.0, %v950
      %952 = vdwg.mxu0
      %v953 = vadd.f32 %v775, %v951
      %s954 = scalar_lea.vmem %s3, 96
      %v955 = vld [vmem:[%s954] sm:$0xff]
      %v956 = vld [vmem:[%s954 + $0x8] sm:$0xff]
      %v957 = vld [vmem:[%s954 + $0x10] sm:$0xff]
      %v958 = vld [vmem:[%s954 + $0x18] sm:$0xff]
      %s959 = scalar_lea.vmem %s4, 3
      %v960 = vld [vmem:[%s959] sm:$0x1]
      %v962 = vperm.slane %v960, 0
      %964 = vmatpush.msra.mxu0 0.0
      %965 = vmatpush.msra.mxu0 0.0
      %966 = vmatpush.msra.mxu0 0.0
      %967 = vmatpush.msra.mxu0 0.0
      %968 = vmatpush.msra.mxu0 0.0
      %969 = vmatpush.msra.mxu0 0.0
      %970 = vmatpush.msra.mxu0 0.0
      %971 = vmatpush.msra.mxu0 0.0
      %972 = vmatpush.msra.mxu0 0.0
      %973 = vmatpush.msra.mxu0 0.0
      %974 = vmatpush.msra.mxu0 0.0
      %975 = vmatpush.msra.mxu0 0.0
      %976 = vmatpush.msra.mxu0 %v958
      %977 = vmatpush.msra.mxu0 %v957
      %978 = vmatpush.msra.mxu0 %v956
      %979 = vmatpush.msra.mxu0 %v955
      %980 = vmatmul.f32.gmra.mxu0 %v437
      %v981 = vpop.f32.mrf.mxu0
      %v982 = vadd.f32 %v962, %v981
      %983 = vdwg.mxu0
      %s984 = scalar_lea.vmem %s5, 96
      %v985 = vld [vmem:[%s984] sm:$0xff]
      %v986 = vld [vmem:[%s984 + $0x8] sm:$0xff]
      %v987 = vld [vmem:[%s984 + $0x10] sm:$0xff]
      %v988 = vld [vmem:[%s984 + $0x18] sm:$0xff]
      %s989 = scalar_lea.vmem %s6, 3
      %v990 = vld [vmem:[%s989] sm:$0x1]
      %v992 = vperm.slane %v990, 0
      %994 = vmatpush.msra.mxu0 0.0
      %995 = vmatpush.msra.mxu0 0.0
      %996 = vmatpush.msra.mxu0 0.0
      %997 = vmatpush.msra.mxu0 0.0
      %998 = vmatpush.msra.mxu0 0.0
      %999 = vmatpush.msra.mxu0 0.0
      %1000 = vmatpush.msra.mxu0 0.0
      %1001 = vmatpush.msra.mxu0 0.0
      %1002 = vmatpush.msra.mxu0 0.0
      %1003 = vmatpush.msra.mxu0 0.0
      %1004 = vmatpush.msra.mxu0 0.0
      %1005 = vmatpush.msra.mxu0 0.0
      %1006 = vmatpush.msra.mxu0 %v988
      %1007 = vmatpush.msra.mxu0 %v987
      %1008 = vmatpush.msra.mxu0 %v986
      %1009 = vmatpush.msra.mxu0 %v985
      %1010 = vmatmul.f32.gmra.mxu0 %v437
      %v1011 = vpop.f32.mrf.mxu0
      %v1012 = vadd.f32 %v992, %v1011
      %1013 = vdwg.mxu0
      %s1014 = scalar_lea.vmem %s7, 96
      %v1015 = vld [vmem:[%s1014] sm:$0xff]
      %v1016 = vld [vmem:[%s1014 + $0x8] sm:$0xff]
      %v1017 = vld [vmem:[%s1014 + $0x10] sm:$0xff]
      %v1018 = vld [vmem:[%s1014 + $0x18] sm:$0xff]
      %s1019 = scalar_lea.vmem %s8, 3
      %v1020 = vld [vmem:[%s1019] sm:$0x1]
      %v1022 = vperm.slane %v1020, 0
      %1024 = vmatpush.msra.mxu0 0.0
      %1025 = vmatpush.msra.mxu0 0.0
      %1026 = vmatpush.msra.mxu0 0.0
      %1027 = vmatpush.msra.mxu0 0.0
      %1028 = vmatpush.msra.mxu0 0.0
      %1029 = vmatpush.msra.mxu0 0.0
      %1030 = vmatpush.msra.mxu0 0.0
      %1031 = vmatpush.msra.mxu0 0.0
      %1032 = vmatpush.msra.mxu0 0.0
      %1033 = vmatpush.msra.mxu0 0.0
      %1034 = vmatpush.msra.mxu0 0.0
      %1035 = vmatpush.msra.mxu0 0.0
      %1036 = vmatpush.msra.mxu0 %v1018
      %1037 = vmatpush.msra.mxu0 %v1017
      %1038 = vmatpush.msra.mxu0 %v1016
      %1039 = vmatpush.msra.mxu0 %v1015
      %1040 = vmatmul.f32.gmra.mxu0 %v437
      %v1041 = vpop.f32.mrf.mxu0
      %v1042 = vadd.f32 %v1022, %v1041
      %1043 = vdwg.mxu0
      %v1045 = vsel %vm515, %v982, 0
      %v1048 = vsel %vm515, %v1012, 0
      %1050 = vmatpush.xpose.msra.mxu0 0.0
      %1051 = vmatpush.xpose.msra.mxu0 0.0
      %1052 = vmatpush.xpose.msra.mxu0 0.0
      %1053 = vmatpush.xpose.msra.mxu0 0.0
      %1054 = vmatpush.xpose.msra.mxu0 0.0
      %1055 = vmatpush.xpose.msra.mxu0 0.0
      %1056 = vmatpush.xpose.msra.mxu0 0.0
      %1057 = vmatpush.xpose.msra.mxu0 0.0
      %1058 = vmatpush.xpose.msra.mxu0 0.0
      %1059 = vmatpush.xpose.msra.mxu0 0.0
      %1060 = vmatpush.xpose.msra.mxu0 0.0
      %1061 = vmatpush.xpose.msra.mxu0 0.0
      %1062 = vmatpush.xpose.msra.mxu0 0.0
      %1063 = vmatpush.xpose.msra.mxu0 0.0
      %1064 = vmatpush.xpose.msra.mxu0 0.0
      %1065 = vmatpush.xpose.msra.mxu0 %v1048
      %1066 = vmatmul.f32.gmra.mxu0 %v1045
      %v1067 = vpop.f32.mrf.mxu0
      %v1068 = vadd.f32 0.0, %v1067
      %1069 = vdwg.mxu0
      %v1070 = vsel %vm427, %v1068, -1e+30
      %v1071 = vsel %vm515, %v1070, -inf
      %1072 = vmax.xlane.f32.xlu0 %v1071
      %v1073 = vpop.xlane.xlu0 %1072
      %v1074 = vsub.f32 %v1070, %v1073
      %v1075 = vmul.f32 %v1074, 1.442695
      %v1076 = vpow.pop %v1075
      %v1077 = vsel %vm515, %v1076, 0.0
      %1078 = vadd.xlane.f32.xlu0 %v1077
      %v1079 = vpop.xlane.xlu0 %1078
      %v1080 = vrcp.pop %v1079
      %v1081 = vmul.f32 %v1076, %v1080
      %v1083 = vsel %vm515, %v1081, 0
      %1085 = vmatpush.msra.mxu0 0.0
      %1086 = vmatpush.msra.mxu0 0.0
      %1087 = vmatpush.msra.mxu0 0.0
      %1088 = vmatpush.msra.mxu0 0.0
      %1089 = vmatpush.msra.mxu0 0.0
      %1090 = vmatpush.msra.mxu0 0.0
      %1091 = vmatpush.msra.mxu0 0.0
      %1092 = vmatpush.msra.mxu0 0.0
      %1093 = vmatpush.msra.mxu0 0.0
      %1094 = vmatpush.msra.mxu0 0.0
      %1095 = vmatpush.msra.mxu0 0.0
      %1096 = vmatpush.msra.mxu0 0.0
      %1097 = vmatpush.msra.mxu0 0.0
      %1098 = vmatpush.msra.mxu0 0.0
      %1099 = vmatpush.msra.mxu0 0.0
      %1100 = vmatpush.msra.mxu0 %v1042
      %1101 = vmatmul.f32.gmra.mxu0 %v1083
      %v1102 = vpop.f32.mrf.mxu0
      %v1103 = vadd.f32 0.0, %v1102
      %1104 = vdwg.mxu0
      %s1105 = scalar_lea.vmem %s9, 24
      %v1106 = vld [vmem:[%s1105] sm:$0xff]
      %v1108 = vsel %vm515, %v1103, 0
      %1110 = vmatpush.msra.mxu0 0.0
      %1111 = vmatpush.msra.mxu0 0.0
      %1112 = vmatpush.msra.mxu0 0.0
      %1113 = vmatpush.msra.mxu0 0.0
      %1114 = vmatpush.msra.mxu0 0.0
      %1115 = vmatpush.msra.mxu0 0.0
      %1116 = vmatpush.msra.mxu0 0.0
      %1117 = vmatpush.msra.mxu0 0.0
      %1118 = vmatpush.msra.mxu0 0.0
      %1119 = vmatpush.msra.mxu0 0.0
      %1120 = vmatpush.msra.mxu0 0.0
      %1121 = vmatpush.msra.mxu0 0.0
      %1122 = vmatpush.msra.mxu0 0.0
      %1123 = vmatpush.msra.mxu0 0.0
      %1124 = vmatpush.msra.mxu0 0.0
      %1125 = vmatpush.msra.mxu0 %v1106
      %1126 = vmatmul.f32.gmra.mxu0 %v1108
      %v1127 = vpop.f32.mrf.mxu0
      %v1128 = vadd.f32 0.0, %v1127
      %1129 = vdwg.mxu0
      %v1130 = vadd.f32 %v953, %v1128
      %v1131 = vadd.f32 %v382, %v1130
      %v1132 = vld [vmem:[%s10] sm:$0x1]
      %v1134 = vperm.slane %v1132, 0
      %v1136 = vadd.f32 %v1131, %v1134
      %1137 = vst.msk [vmem:[%s381] sm:$0xff] %vm385, %v1136
      %p1138 = scmp.lt.s32.totalorder %s22, 1
      %s1139 = scalar_select %p1138, %s22, 1
      %s1140 = smul.addr %s1139, 8
      %s1141 = scalar_lea.vmem %s11, %s1140
      // Predicated region
      $region65: #{encode_text.5} parent=63 // pred_check
        %p1142 = pneg %p276
      $region66: #{encode_text.5} parent=63 // pred_check_branch
        %1144 = sbr.rel (%p1142) target = $region68
      $region67: #{encode_text.5} parent=63 // pred_region
        _
      $region68: #{encode_text.5} parent=63 // pred_fallthru
        _
    $region64: #{encode_text.5} parent=5 // pred_fallthru
      _
    %p1145 = scmp.le.s32.totalorder 2, %s17
    // Predicated region
    $region69: #{encode_text.5} parent=5 // pred_check
      %p1146 = pneg %p1145
    $region70: #{encode_text.5} parent=5 // pred_check_branch
      %1148 = sbr.rel (%p1146) target = $region72
    $region71: #{encode_text.5} parent=5 // pred_region
      %s1149 = ssub.s32 %s17, 2
      // Predicated region
      $region73: #{encode_text.5} parent=71 // pred_check
        %p1150 = pneg %p282
      $region74: #{encode_text.5} parent=71 // pred_check_branch
        %1152 = sbr.rel (%p1150) target = $region76
      $region75: #{encode_text.5} parent=71 // pred_region
        %p1153 = scmp.lt.s32.totalorder %s23, 1
        %s1154 = scalar_select %p1153, %s23, 1
        %s1155 = smul.addr %s1154, 8
        %s1156 = scalar_lea.vmem %s11, %s1155
      $region76: #{encode_text.5} parent=71 // pred_fallthru
        _
    $region72: #{encode_text.5} parent=5 // pred_fallthru
      _
  $region6: #{encode_text.5} parent=0 // loop_footer
    %s21 = sadd.s32 1, %s17
  $region7: #{encode_text.5} parent=0 // loop_footer_branch
    %16 = sbr.rel target = $region3
  $region8: #{encode_text.5} parent=0 // loop_exit
    _

</llo_original>
